<compile_context>
chip_gen: v6e
topology: v6e:2x2x1
jax: 0.10.0
libtpu: 0.0.40
codegen_flags: <defaults>
</compile_context>

<pallas_src>
import numpy as np
import jax
import jax.numpy as jnp
from jax.experimental import pallas as pl
from jax.experimental.pallas import tpu as pltpu


KH = KW = 3        # first candidates of ValueSpace([3,5,7]) / OperationSpace -> 3x3
STRIDE = 2         # ValueSpace([2]) -> 2
PAD = 1            # auto_padding for k=3 -> 1
CO_PAD = 8         # channel padding used for the fused layer-1/2 output


def _conv_out(n):                      # output size for k=3, s=2, p=1
    return (n + 2 * PAD - KH) // STRIDE + 1


# --------------------------------------------------------------------------- #
# Static 0/1 constants (numpy, trace/prepare time only).
# --------------------------------------------------------------------------- #
def _gather_mats(B, H, W, stride, pad):
    """G[kpos, B*H*W, B*Ho*Wo]: im2col of a padded/strided 3x3 conv as matmul."""
    Ho = (H + 2 * pad - KH) // stride + 1
    Wo = (W + 2 * pad - KW) // stride + 1
    G = np.zeros((KH * KW, B * H * W, B * Ho * Wo), np.float32)
    for b in range(B):
        for ho in range(Ho):
            for wo in range(Wo):
                m = (b * Ho + ho) * Wo + wo
                for i in range(KH):
                    for j in range(KW):
                        h = ho * stride + i - pad
                        w = wo * stride + j - pad
                        if 0 <= h < H and 0 <= w < W:
                            G[i * KW + j, (b * H + h) * W + w, m] = 1.0
    return G


def _valid_mask(B, H, W, stride, pad):
    """mask[kpos, B*Ho*Wo] = 1 iff the tap lands inside the un-padded input."""
    Ho = (H + 2 * pad - KH) // stride + 1
    Wo = (W + 2 * pad - KW) // stride + 1
    mask = np.zeros((KH * KW, B, Ho, Wo), np.float32)
    ho = np.arange(Ho)[:, None] * stride
    wo = np.arange(Wo)[None, :] * stride
    for i in range(KH):
        for j in range(KW):
            h = ho + i - pad
            w = wo + j - pad
            valid = (h >= 0) & (h < H) & (w >= 0) & (w < W)
            mask[i * KW + j] = valid.astype(np.float32)[None]
    return mask.reshape(KH * KW, B * Ho * Wo)


# ------------------------------- Pallas kernel ------------------------------ #
def _net_kernel(a2t_ref, g3_ref, wf_ref, w3s_ref, slab_ref, o_ref):
    f32 = jnp.float32
    cop = wf_ref.shape[0]            # 8  (padded layer-2 channels)
    co3 = o_ref.shape[0]             # 8  (fop2 out channels)
    m3 = g3_ref.shape[2]             # 32 (valid output lanes)

    # ---- layers 1+2 fused: one GEMM + pre-folded biases (b2 + masked W2·b1) ---
    out2 = jnp.dot(wf_ref[...], a2t_ref[...], preferred_element_type=f32)
    out2 = out2 + slab_ref[0:cop, :]                             # [8, 128]

    # ---- layer 3 (fop2, k=3, s=2, p=1): all 9 tap-weights in one GEMM, then
    #      nine 0/1 gather matmuls against the stride-2 gather constants.
    v_all = jnp.dot(w3s_ref[...], out2, preferred_element_type=f32)   # [72, 128]
    acc = jnp.zeros((co3, m3), f32)
    for k in range(g3_ref.shape[0]):                             # unrolled, 9 taps
        acc = acc + jnp.dot(v_all[co3 * k:co3 * (k + 1), :],
                            g3_ref[k].astype(f32),
                            preferred_element_type=f32)

    # lane-dense [8, 128] store (wrapper slices the valid 32 lanes); + bias b3.
    pad = jnp.zeros((co3, o_ref.shape[1] - m3), f32)
    o_ref[...] = jnp.concatenate([acc, pad], axis=1) + slab_ref[cop:cop + co3, :]


# ------------------------- Parameters & one-time prep ----------------------- #
def init_params(key):
    ks = jax.random.split(key, 8)
    scale = 0.1
    return {
        # candidate_op1 / candidate_op2 : first candidate = Conv2d(3,4,k=3,p=1)
        "cand1_w": scale * jax.random.normal(ks[0], (4, 3, 3, 3), jnp.float32),
        "cand1_b": scale * jax.random.normal(ks[1], (4,), jnp.float32),
        "cand2_w": scale * jax.random.normal(ks[2], (4, 3, 3, 3), jnp.float32),  # unused: output discarded by input_op
        "cand2_b": scale * jax.random.normal(ks[3], (4,), jnp.float32),
        # fop1: Conv2d(4, 4, k=3, s=2, p=1)
        "fop1_w": scale * jax.random.normal(ks[4], (4, 4, 3, 3), jnp.float32),
        "fop1_b": scale * jax.random.normal(ks[5], (4,), jnp.float32),
        # fop2: Conv2d(4, 8, k=3, s=2, p=1)
        "fop2_w": scale * jax.random.normal(ks[6], (8, 4, 3, 3), jnp.float32),
        "fop2_b": scale * jax.random.normal(ks[7], (8,), jnp.float32),
    }


def prepare_params(p, *, B, H, W):
    """One-time re-layout / folding of all weights into kernel operands."""
    f32 = jnp.float32
    co1, cin = p["cand1_w"].shape[:2]            # 4, 3
    co2 = p["fop1_w"].shape[0]                   # 4
    co3 = p["fop2_w"].shape[0]                   # 8
    K1 = KH * KW * cin                           # 27
    K1P = -(-K1 // 8) * 8                        # 32  (plain round-up, no spurious +8)
    H2, W2 = _conv_out(H), _conv_out(W)          # 8, 8

    # layer-1 weight in im2col layout, K index = (kh*3+kw)*cin + ci, padded to 32
    w1t = jnp.transpose(p["cand1_w"], (2, 3, 1, 0)).reshape(K1, co1).T   # [4, 27]
    w1t = jnp.pad(w1t, ((0, 0), (0, K1P - K1)))                          # [4, 32]

    # fused (fop1 ∘ candidate_op1) weight: Wf[:, k2*32:(k2+1)*32] = W2[:,:,i,j] @ W1ᵀ
    w2 = p["fop1_w"]
    wf = jnp.concatenate([w2[:, :, i, j] @ w1t
                          for i in range(KH) for j in range(KW)], axis=1)   # [4, 288]
    wf8 = jnp.pad(wf, ((0, CO_PAD - co2), (0, 0))).astype(f32)              # [8, 288]

    # layer-1 bias propagated through fop1 with a per-tap validity mask, + b2
    mask2 = jnp.asarray(_valid_mask(B, H, W, STRIDE, PAD))                   # [9, 128]
    w2b1 = jnp.stack([w2[:, :, i, j] @ p["cand1_b"]
                      for i in range(KH) for j in range(KW)], axis=0)        # [9, 4]
    bias2 = jnp.einsum("kc,km->cm", w2b1, mask2) + p["fop1_b"][:, None]      # [4, 128]
    bias2 = jnp.pad(bias2, ((0, CO_PAD - co2), (0, 0)))                      # [8, 128]

    # fop2 weights stacked per tap: rows (k3*co3 + c3), ci padded 4 -> 8
    w3 = p["fop2_w"]
    w3s = jnp.concatenate([w3[:, :, i, j]
                           for i in range(KH) for j in range(KW)], axis=0)   # [72, 4]
    w3s = jnp.pad(w3s, ((0, 0), (0, CO_PAD - w3.shape[1]))).astype(f32)      # [72, 8]

    # fop2 bias broadcast across the padded 128-lane output rows
    b3row = jnp.broadcast_to(p["fop2_b"][:, None], (co3, 128)).astype(f32)   # [8, 128]

    # small-parameter slab: two full-lane blocks -> a single DMA
    slab = jnp.concatenate([bias2, b3row], axis=0).astype(f32)               # [16, 128]

    # layer-3 0/1 gather matrices (exact in bf16 -> half the DMA bytes)
    g3 = jnp.asarray(_gather_mats(B, H2, W2, STRIDE, PAD), jnp.bfloat16)     # [9, 128, 32]

    return {"wf8": wf8, "w3s": w3s, "slab": slab, "g3": g3}


# ------------------------------- Net forward -------------------------------- #
def net_forward(x_nchw, prep):
    B, cin, H, W = x_nchw.shape
    K1 = KH * KW * cin
    K1P = prep["wf8"].shape[1] // (KH * KW)
    co3 = prep["w3s"].shape[0] // (KH * KW)
    H2, W2 = _conv_out(H), _conv_out(W)
    H3, W3 = _conv_out(H2), _conv_out(W2)
    M2, M3 = B * H2 * W2, B * H3 * W3
    out_lanes = prep["slab"].shape[1]

    # NOTE: candidate_op2(x) is computed in the PyTorch forward but its output is
    # discarded by input_op (n_chosen=1, first candidate); it is dropped here.
    # TODO(synk): dynamic NAS choice sampling (mutator) has no Pallas equivalent;
    # all mutables are resolved statically to their first candidate.

    # ---- layer-1 im2col (k=3, s=1, p=1); K index = (kh*3+kw)*cin + ci, pad -> 32
    xpad = jnp.pad(x_nchw, ((0, 0), (0, 0), (1, 1), (1, 1)))
    a1 = jnp.stack([xpad[:, :, i:i + H, j:j + W]
                    for i in range(KH) for j in range(KW)], 0)      # [9, B, cin, H, W]
    a1 = a1.transpose(0, 2, 1, 3, 4).reshape(K1, B, H, W)
    a1 = jnp.pad(a1, ((0, K1P - K1), (0, 0), (0, 0), (0, 0)))       # [32, B, H, W]

    # ---- hoisted fop1 im2col (s=2, p=1) applied directly to the layer-1 patches:
    # replaces the former [9, 512, 128] gather-matrix input (2.25 MiB) entirely.
    a1p = jnp.pad(a1, ((0, 0), (0, 0), (1, 1), (1, 1)))             # [32, B, H+2, W+2]
    a2 = jnp.stack([a1p[:, :, i:i + H:STRIDE, j:j + W:STRIDE]
                    for i in range(KH) for j in range(KW)], 0)      # [9, 32, B, H2, W2]
    a2t = a2.reshape(KH * KW * K1P, M2)                             # [288, 128]

    flops = 2 * (CO_PAD * a2t.shape[0] * M2                         # fused L1+L2 GEMM
                 + prep["w3s"].shape[0] * CO_PAD * M2               # L3 weight GEMM
                 + KH * KW * co3 * M2 * M3)                         # L3 gather GEMMs
    bytes_accessed = (a2t.size * 4 + prep["g3"].size * 2 + prep["wf8"].size * 4
                      + prep["w3s"].size * 4 + prep["slab"].size * 4
                      + co3 * out_lanes * 4)

    out = pl.pallas_call(
        _net_kernel,
        out_shape=jax.ShapeDtypeStruct((co3, out_lanes), jnp.float32),
        in_specs=[pl.BlockSpec(memory_space=pltpu.MemorySpace.VMEM)] * 5,
        out_specs=pl.BlockSpec(memory_space=pltpu.MemorySpace.VMEM),
        cost_estimate=pl.CostEstimate(flops=int(flops), transcendentals=0,
                                      bytes_accessed=int(bytes_accessed)),
    )(a2t, prep["g3"], prep["wf8"], prep["w3s"], prep["slab"])

    # [co3, padded lanes] -> slice valid 32 lanes -> NCHW
    return out[:, :M3].reshape(co3, B, H3, W3).transpose(1, 0, 2, 3)


# ------------------------------ Reference (check) ---------------------------- #
def _conv_ref(x_nhwc, w_oihw, bias, stride, padding):
    w_hwio = jnp.transpose(w_oihw, (2, 3, 1, 0))
    y = jax.lax.conv_general_dilated(
        x_nhwc, w_hwio, (stride, stride),
        [(padding, padding), (padding, padding)],
        dimension_numbers=("NHWC", "HWIO", "NHWC"))
    return y + bias[None, None, None, :]


def _net_ref(x_nchw, p):
    x = jnp.transpose(x_nchw, (0, 2, 3, 1))
    out = _conv_ref(x, p["cand1_w"], p["cand1_b"], 1, 1)
    out = _conv_ref(out, p["fop1_w"], p["fop1_b"], 2, 1)
    out = _conv_ref(out, p["fop2_w"], p["fop2_b"], 2, 1)
    return jnp.transpose(out, (0, 3, 1, 2))


if __name__ == "__main__":
    key = jax.random.PRNGKey(0)
    pkey, xkey = jax.random.split(key)
    params = init_params(pkey)
    x = jax.random.normal(xkey, (2, 3, 16, 16), jnp.float32)   # NCHW

    prep = prepare_params(params, B=2, H=16, W=16)             # one-time re-layout
    fwd = jax.jit(net_forward)
    out = jax.block_until_ready(fwd(x, prep))

    assert out.shape == (2, 8, 4, 4), out.shape
    ref = _net_ref(x, params)
    assert jnp.allclose(out, ref, atol=1e-4, rtol=1e-4), \
        float(jnp.max(jnp.abs(out - ref)))

    print("KERNEL_OK")
</pallas_src>

<mosaic_0001>
module attributes {stable_mosaic.version = 11 : i64} {
  func.func @_net_kernel(%arg0: memref<288x128xf32, #tpu.memory_space<vmem>>, %arg1: memref<9x128x32xbf16, #tpu.memory_space<vmem>>, %arg2: memref<8x288xf32, #tpu.memory_space<vmem>>, %arg3: memref<72x8xf32, #tpu.memory_space<vmem>>, %arg4: memref<16x128xf32, #tpu.memory_space<vmem>>, %arg5: memref<8x128xf32, #tpu.memory_space<vmem>>) attributes {dimension_semantics = [], scalar_prefetch = 0 : i64, scratch_operands = 0 : i64, tpu.core_type = #tpu.core_type<tc>} {
    %c0 = arith.constant 0 : index
    %c0_0 = arith.constant 0 : index
    %0 = vector.load %arg2[%c0, %c0_0] : memref<8x288xf32, #tpu.memory_space<vmem>>, vector<8x288xf32>
    %c0_1 = arith.constant 0 : index
    %c0_2 = arith.constant 0 : index
    %1 = vector.load %arg0[%c0_1, %c0_2] : memref<288x128xf32, #tpu.memory_space<vmem>>, vector<288x128xf32>
    %cst = arith.constant dense<0.000000e+00> : vector<8x128xf32>
    %2 = tpu.matmul %0, %1, %cst {dimension_numbers = #tpu.dot_dimension_numbers<[1], [0], [0], [1], [0, 0, 1, 1], [], []>} : vector<8x288xf32>, vector<288x128xf32>, vector<8x128xf32> -> vector<8x128xf32>
    %c0_3 = arith.constant 0 : index
    %c0_4 = arith.constant 0 : index
    %3 = vector.load %arg4[%c0_3, %c0_4] : memref<16x128xf32, #tpu.memory_space<vmem>>, vector<8x128xf32>
    %4 = arith.addf %2, %3 : vector<8x128xf32>
    %c0_5 = arith.constant 0 : index
    %c0_6 = arith.constant 0 : index
    %5 = vector.load %arg3[%c0_5, %c0_6] : memref<72x8xf32, #tpu.memory_space<vmem>>, vector<72x8xf32>
    %cst_7 = arith.constant dense<0.000000e+00> : vector<72x128xf32>
    %6 = tpu.matmul %5, %4, %cst_7 {dimension_numbers = #tpu.dot_dimension_numbers<[1], [0], [0], [1], [0, 0, 1, 1], [], []>} : vector<72x8xf32>, vector<8x128xf32>, vector<72x128xf32> -> vector<72x128xf32>
    %cst_8 = arith.constant 0.000000e+00 : f32
    %7 = vector.broadcast %cst_8 : f32 to vector<8x32xf32>
    %8 = vector.extract_strided_slice %6 {offsets = [0, 0], sizes = [8, 128], strides = [1, 1]} : vector<72x128xf32> to vector<8x128xf32>
    %c0_9 = arith.constant 0 : index
    %c0_10 = arith.constant 0 : index
    %c0_11 = arith.constant 0 : index
    %9 = vector.load %arg1[%c0_9, %c0_10, %c0_11] : memref<9x128x32xbf16, #tpu.memory_space<vmem>>, vector<1x128x32xbf16>
    %10 = vector.shape_cast %9 : vector<1x128x32xbf16> to vector<128x32xbf16>
    %11 = arith.extf %10 : vector<128x32xbf16> to vector<128x32xf32>
    %cst_12 = arith.constant dense<0.000000e+00> : vector<8x32xf32>
    %12 = tpu.matmul %8, %11, %cst_12 {dimension_numbers = #tpu.dot_dimension_numbers<[1], [0], [0], [1], [0, 0, 1, 1], [], []>} : vector<8x128xf32>, vector<128x32xf32>, vector<8x32xf32> -> vector<8x32xf32>
    %13 = arith.addf %7, %12 : vector<8x32xf32>
    %14 = vector.extract_strided_slice %6 {offsets = [8, 0], sizes = [8, 128], strides = [1, 1]} : vector<72x128xf32> to vector<8x128xf32>
    %c1 = arith.constant 1 : index
    %c0_13 = arith.constant 0 : index
    %c0_14 = arith.constant 0 : index
    %15 = vector.load %arg1[%c1, %c0_13, %c0_14] : memref<9x128x32xbf16, #tpu.memory_space<vmem>>, vector<1x128x32xbf16>
    %16 = vector.shape_cast %15 : vector<1x128x32xbf16> to vector<128x32xbf16>
    %17 = arith.extf %16 : vector<128x32xbf16> to vector<128x32xf32>
    %cst_15 = arith.constant dense<0.000000e+00> : vector<8x32xf32>
    %18 = tpu.matmul %14, %17, %cst_15 {dimension_numbers = #tpu.dot_dimension_numbers<[1], [0], [0], [1], [0, 0, 1, 1], [], []>} : vector<8x128xf32>, vector<128x32xf32>, vector<8x32xf32> -> vector<8x32xf32>
    %19 = arith.addf %13, %18 : vector<8x32xf32>
    %20 = vector.extract_strided_slice %6 {offsets = [16, 0], sizes = [8, 128], strides = [1, 1]} : vector<72x128xf32> to vector<8x128xf32>
    %c2 = arith.constant 2 : index
    %c0_16 = arith.constant 0 : index
    %c0_17 = arith.constant 0 : index
    %21 = vector.load %arg1[%c2, %c0_16, %c0_17] : memref<9x128x32xbf16, #tpu.memory_space<vmem>>, vector<1x128x32xbf16>
    %22 = vector.shape_cast %21 : vector<1x128x32xbf16> to vector<128x32xbf16>
    %23 = arith.extf %22 : vector<128x32xbf16> to vector<128x32xf32>
    %cst_18 = arith.constant dense<0.000000e+00> : vector<8x32xf32>
    %24 = tpu.matmul %20, %23, %cst_18 {dimension_numbers = #tpu.dot_dimension_numbers<[1], [0], [0], [1], [0, 0, 1, 1], [], []>} : vector<8x128xf32>, vector<128x32xf32>, vector<8x32xf32> -> vector<8x32xf32>
    %25 = arith.addf %19, %24 : vector<8x32xf32>
    %26 = vector.extract_strided_slice %6 {offsets = [24, 0], sizes = [8, 128], strides = [1, 1]} : vector<72x128xf32> to vector<8x128xf32>
    %c3 = arith.constant 3 : index
    %c0_19 = arith.constant 0 : index
    %c0_20 = arith.constant 0 : index
    %27 = vector.load %arg1[%c3, %c0_19, %c0_20] : memref<9x128x32xbf16, #tpu.memory_space<vmem>>, vector<1x128x32xbf16>
    %28 = vector.shape_cast %27 : vector<1x128x32xbf16> to vector<128x32xbf16>
    %29 = arith.extf %28 : vector<128x32xbf16> to vector<128x32xf32>
    %cst_21 = arith.constant dense<0.000000e+00> : vector<8x32xf32>
    %30 = tpu.matmul %26, %29, %cst_21 {dimension_numbers = #tpu.dot_dimension_numbers<[1], [0], [0], [1], [0, 0, 1, 1], [], []>} : vector<8x128xf32>, vector<128x32xf32>, vector<8x32xf32> -> vector<8x32xf32>
    %31 = arith.addf %25, %30 : vector<8x32xf32>
    %32 = vector.extract_strided_slice %6 {offsets = [32, 0], sizes = [8, 128], strides = [1, 1]} : vector<72x128xf32> to vector<8x128xf32>
    %c4 = arith.constant 4 : index
    %c0_22 = arith.constant 0 : index
    %c0_23 = arith.constant 0 : index
    %33 = vector.load %arg1[%c4, %c0_22, %c0_23] : memref<9x128x32xbf16, #tpu.memory_space<vmem>>, vector<1x128x32xbf16>
    %34 = vector.shape_cast %33 : vector<1x128x32xbf16> to vector<128x32xbf16>
    %35 = arith.extf %34 : vector<128x32xbf16> to vector<128x32xf32>
    %cst_24 = arith.constant dense<0.000000e+00> : vector<8x32xf32>
    %36 = tpu.matmul %32, %35, %cst_24 {dimension_numbers = #tpu.dot_dimension_numbers<[1], [0], [0], [1], [0, 0, 1, 1], [], []>} : vector<8x128xf32>, vector<128x32xf32>, vector<8x32xf32> -> vector<8x32xf32>
    %37 = arith.addf %31, %36 : vector<8x32xf32>
    %38 = vector.extract_strided_slice %6 {offsets = [40, 0], sizes = [8, 128], strides = [1, 1]} : vector<72x128xf32> to vector<8x128xf32>
    %c5 = arith.constant 5 : index
    %c0_25 = arith.constant 0 : index
    %c0_26 = arith.constant 0 : index
    %39 = vector.load %arg1[%c5, %c0_25, %c0_26] : memref<9x128x32xbf16, #tpu.memory_space<vmem>>, vector<1x128x32xbf16>
    %40 = vector.shape_cast %39 : vector<1x128x32xbf16> to vector<128x32xbf16>
    %41 = arith.extf %40 : vector<128x32xbf16> to vector<128x32xf32>
    %cst_27 = arith.constant dense<0.000000e+00> : vector<8x32xf32>
    %42 = tpu.matmul %38, %41, %cst_27 {dimension_numbers = #tpu.dot_dimension_numbers<[1], [0], [0], [1], [0, 0, 1, 1], [], []>} : vector<8x128xf32>, vector<128x32xf32>, vector<8x32xf32> -> vector<8x32xf32>
    %43 = arith.addf %37, %42 : vector<8x32xf32>
    %44 = vector.extract_strided_slice %6 {offsets = [48, 0], sizes = [8, 128], strides = [1, 1]} : vector<72x128xf32> to vector<8x128xf32>
    %c6 = arith.constant 6 : index
    %c0_28 = arith.constant 0 : index
    %c0_29 = arith.constant 0 : index
    %45 = vector.load %arg1[%c6, %c0_28, %c0_29] : memref<9x128x32xbf16, #tpu.memory_space<vmem>>, vector<1x128x32xbf16>
    %46 = vector.shape_cast %45 : vector<1x128x32xbf16> to vector<128x32xbf16>
    %47 = arith.extf %46 : vector<128x32xbf16> to vector<128x32xf32>
    %cst_30 = arith.constant dense<0.000000e+00> : vector<8x32xf32>
    %48 = tpu.matmul %44, %47, %cst_30 {dimension_numbers = #tpu.dot_dimension_numbers<[1], [0], [0], [1], [0, 0, 1, 1], [], []>} : vector<8x128xf32>, vector<128x32xf32>, vector<8x32xf32> -> vector<8x32xf32>
    %49 = arith.addf %43, %48 : vector<8x32xf32>
    %50 = vector.extract_strided_slice %6 {offsets = [56, 0], sizes = [8, 128], strides = [1, 1]} : vector<72x128xf32> to vector<8x128xf32>
    %c7 = arith.constant 7 : index
    %c0_31 = arith.constant 0 : index
    %c0_32 = arith.constant 0 : index
    %51 = vector.load %arg1[%c7, %c0_31, %c0_32] : memref<9x128x32xbf16, #tpu.memory_space<vmem>>, vector<1x128x32xbf16>
    %52 = vector.shape_cast %51 : vector<1x128x32xbf16> to vector<128x32xbf16>
    %53 = arith.extf %52 : vector<128x32xbf16> to vector<128x32xf32>
    %cst_33 = arith.constant dense<0.000000e+00> : vector<8x32xf32>
    %54 = tpu.matmul %50, %53, %cst_33 {dimension_numbers = #tpu.dot_dimension_numbers<[1], [0], [0], [1], [0, 0, 1, 1], [], []>} : vector<8x128xf32>, vector<128x32xf32>, vector<8x32xf32> -> vector<8x32xf32>
    %55 = arith.addf %49, %54 : vector<8x32xf32>
    %56 = vector.extract_strided_slice %6 {offsets = [64, 0], sizes = [8, 128], strides = [1, 1]} : vector<72x128xf32> to vector<8x128xf32>
    %c8 = arith.constant 8 : index
    %c0_34 = arith.constant 0 : index
    %c0_35 = arith.constant 0 : index
    %57 = vector.load %arg1[%c8, %c0_34, %c0_35] : memref<9x128x32xbf16, #tpu.memory_space<vmem>>, vector<1x128x32xbf16>
    %58 = vector.shape_cast %57 : vector<1x128x32xbf16> to vector<128x32xbf16>
    %59 = arith.extf %58 : vector<128x32xbf16> to vector<128x32xf32>
    %cst_36 = arith.constant dense<0.000000e+00> : vector<8x32xf32>
    %60 = tpu.matmul %56, %59, %cst_36 {dimension_numbers = #tpu.dot_dimension_numbers<[1], [0], [0], [1], [0, 0, 1, 1], [], []>} : vector<8x128xf32>, vector<128x32xf32>, vector<8x32xf32> -> vector<8x32xf32>
    %61 = arith.addf %55, %60 : vector<8x32xf32>
    %cst_37 = arith.constant 0.000000e+00 : f32
    %62 = vector.broadcast %cst_37 : f32 to vector<8x96xf32>
    %63 = tpu.concatenate %61, %62 in 1 : vector<8x32xf32>, vector<8x96xf32> -> vector<8x128xf32>
    %c8_38 = arith.constant 8 : index
    %c0_39 = arith.constant 0 : index
    %64 = vector.load %arg4[%c8_38, %c0_39] : memref<16x128xf32, #tpu.memory_space<vmem>>, vector<8x128xf32>
    %65 = arith.addf %63, %64 : vector<8x128xf32>
    %c0_40 = arith.constant 0 : index
    %c0_41 = arith.constant 0 : index
    %66 = vector.load %arg5[%c0_40, %c0_41] : memref<8x128xf32, #tpu.memory_space<vmem>>, vector<8x128xf32>
    tpu.vector_store %arg5[%c0_40, %c0_41], %65 {strides = array<i32>} : memref<8x128xf32, #tpu.memory_space<vmem>>, vector<8x128xf32>,
    return
  }
}

</mosaic_0001>

<llo_original>
// kernel: net_forward.1
$region0: #{net_forward.1}
  #allocation0 [shape = 'u32[]', space=smem, size = 0x4, offset = 0x4, fixed_abs, tag = 'smem constant byte address 0x4 - core index']
  #allocation1 [shape = 'u32[144,128]{1,0:T(1,128)}', space=vmem, size = 0x12000, scoped, tag = 'internal scratch']
  %s0 = inlined_call_operand.vmem [shape: f32[288,128], index: 0, kind: input, shape index: {}]
  %s1 = inlined_call_operand.vmem [shape: bf16[9,128,32], index: 1, kind: input, shape index: {}]
  %s2 = inlined_call_operand.vmem [shape: f32[8,288], index: 2, kind: input, shape index: {}]
  %s3 = inlined_call_operand.vmem [shape: f32[72,8], index: 3, kind: input, shape index: {}]
  %s4 = inlined_call_operand.vmem [shape: f32[16,128], index: 4, kind: input, shape index: {}]
  %s5 = inlined_call_operand.vmem [shape: f32[8,128], index: 5, kind: output, shape index: {}]
  %s6 = sld [smem:[#allocation0]]
  $region30: #{net_forward.1} parent=0
    _
  %s8 = ssub.s32 1, %s6
  %s9 = scalar_select 0, %s8, %s6
  // Predicated region
  $region2: #{net_forward.1} parent=0 // pred_check
    _
  $region3: #{net_forward.1} parent=0 // pred_check_branch
    %11 = sbr.rel (0) target = $region5
  $region4: #{net_forward.1} parent=0 // pred_region
    _
  $region5: #{net_forward.1} parent=0 // pred_fallthru
    _
  // Predicated region
  $region6: #{net_forward.1} parent=0 // pred_check
    _
  $region7: #{net_forward.1} parent=0 // pred_check_branch
    %13 = sbr.rel (0) target = $region9
  $region8: #{net_forward.1} parent=0 // pred_region
    _
  $region9: #{net_forward.1} parent=0 // pred_fallthru
    _
  // Predicated region
  $region10: #{net_forward.1} parent=0 // pred_check
    _
  $region11: #{net_forward.1} parent=0 // pred_check_branch
    %15 = sbr.rel (0) target = $region13
  $region12: #{net_forward.1} parent=0 // pred_region
    _
  $region13: #{net_forward.1} parent=0 // pred_fallthru
    _
  // Predicated region
  $region14: #{net_forward.1} parent=0 // pred_check
    _
  $region15: #{net_forward.1} parent=0 // pred_check_branch
    %17 = sbr.rel (0) target = $region17
  $region16: #{net_forward.1} parent=0 // pred_region
    _
  $region17: #{net_forward.1} parent=0 // pred_fallthru
    _
  // Predicated region
  $region18: #{net_forward.1} parent=0 // pred_check
    _
  $region19: #{net_forward.1} parent=0 // pred_check_branch
    %19 = sbr.rel (0) target = $region21
  $region20: #{net_forward.1} parent=0 // pred_region
    _
  $region21: #{net_forward.1} parent=0 // pred_fallthru
    _
  %v20 = vld [vmem:[%s2] sm:$0xff]
  %v21 = vld [vmem:[%s2 + $0x8] sm:$0xff]
  %v22 = vld [vmem:[%s2 + $0x10] sm:$0xff]
  %v23 = vld [vmem:[%s0] sm:$0xff]
  %v24 = vld [vmem:[%s0 + $0x8] sm:$0xff]
  %v25 = vld [vmem:[%s0 + $0x10] sm:$0xff]
  %v26 = vld [vmem:[%s0 + $0x18] sm:$0xff]
  %v27 = vld [vmem:[%s0 + $0x20] sm:$0xff]
  %v28 = vld [vmem:[%s0 + $0x28] sm:$0xff]
  %v29 = vld [vmem:[%s0 + $0x30] sm:$0xff]
  %v30 = vld [vmem:[%s0 + $0x38] sm:$0xff]
  %v31 = vld [vmem:[%s0 + $0x40] sm:$0xff]
  %v32 = vld [vmem:[%s0 + $0x48] sm:$0xff]
  %v33 = vld [vmem:[%s0 + $0x50] sm:$0xff]
  %v34 = vld [vmem:[%s0 + $0x58] sm:$0xff]
  %v35 = vld [vmem:[%s0 + $0x60] sm:$0xff]
  %v36 = vld [vmem:[%s0 + $0x68] sm:$0xff]
  %v37 = vld [vmem:[%s0 + $0x70] sm:$0xff]
  %v38 = vld [vmem:[%s0 + $0x78] sm:$0xff]
  %v39 = vld [vmem:[%s0 + $0x80] sm:$0xff]
  %v40 = vld [vmem:[%s0 + $0x88] sm:$0xff]
  %v41 = vld [vmem:[%s0 + $0x90] sm:$0xff]
  %v42 = vld [vmem:[%s0 + $0x98] sm:$0xff]
  %v43 = vld [vmem:[%s0 + $0xa0] sm:$0xff]
  %v44 = vld [vmem:[%s0 + $0xa8] sm:$0xff]
  %v45 = vld [vmem:[%s0 + $0xb0] sm:$0xff]
  %v46 = vld [vmem:[%s0 + $0xb8] sm:$0xff]
  %v47 = vld [vmem:[%s0 + $0xc0] sm:$0xff]
  %v48 = vld [vmem:[%s0 + $0xc8] sm:$0xff]
  %v49 = vld [vmem:[%s0 + $0xd0] sm:$0xff]
  %v50 = vld [vmem:[%s0 + $0xd8] sm:$0xff]
  %v51 = vld [vmem:[%s0 + $0xe0] sm:$0xff]
  %v52 = vld [vmem:[%s0 + $0xe8] sm:$0xff]
  %v53 = vld [vmem:[%s0 + $0xf0] sm:$0xff]
  %v54 = vld [vmem:[%s0 + $0xf8] sm:$0xff]
  %v55 = vld [vmem:[%s0 + $0x100] sm:$0xff]
  %v56 = vld [vmem:[%s0 + $0x108] sm:$0xff]
  %v57 = vld [vmem:[%s0 + $0x110] sm:$0xff]
  %v58 = vld [vmem:[%s0 + $0x118] sm:$0xff]
  %v59 = vld [vmem:[%s4] sm:$0xff]
  %vm60 = vcmask 261120
  %v62 = vsel %vm60, %v22, 0
  %64 = vmatprep.subr.mxu0 0.0
  %65 = vmatpush1.msra.mxu0 %v38
  %66 = vmatprep.subr.mxu0 0.0
  %67 = vmatpush1.msra.mxu0 %v37
  %68 = vmatprep.subr.mxu0 0.0
  %69 = vmatpush1.msra.mxu0 %v36
  %70 = vmatprep.subr.mxu0 0.0
  %71 = vmatpush1.msra.mxu0 %v35
  %72 = vmatprep.subr.mxu0 0.0
  %73 = vmatpush1.msra.mxu0 %v34
  %74 = vmatprep.subr.mxu0 0.0
  %75 = vmatpush1.msra.mxu0 %v33
  %76 = vmatprep.subr.mxu0 0.0
  %77 = vmatpush1.msra.mxu0 %v32
  %78 = vmatprep.subr.mxu0 0.0
  %79 = vmatpush1.msra.mxu0 %v31
  %80 = vmatprep.subr.mxu0 0.0
  %81 = vmatpush1.msra.mxu0 %v30
  %82 = vmatprep.subr.mxu0 0.0
  %83 = vmatpush1.msra.mxu0 %v29
  %84 = vmatprep.subr.mxu0 0.0
  %85 = vmatpush1.msra.mxu0 %v28
  %86 = vmatprep.subr.mxu0 0.0
  %87 = vmatpush1.msra.mxu0 %v27
  %88 = vmatprep.subr.mxu0 0.0
  %89 = vmatpush1.msra.mxu0 %v26
  %90 = vmatprep.subr.mxu0 0.0
  %91 = vmatpush1.msra.mxu0 %v25
  %92 = vmatprep.subr.mxu0 0.0
  %93 = vmatpush1.msra.mxu0 %v24
  %94 = vmatprep.subr.mxu0 0.0
  %95 = vmatpush1.msra.mxu0 %v23
  %96 = vmatprep.subr.mxu0 0.0
  %97 = vmatpush2.msra.mxu0 %v54
  %98 = vmatprep.subr.mxu0 0.0
  %99 = vmatpush2.msra.mxu0 %v53
  %100 = vmatprep.subr.mxu0 0.0
  %101 = vmatpush2.msra.mxu0 %v52
  %102 = vmatprep.subr.mxu0 0.0
  %103 = vmatpush2.msra.mxu0 %v51
  %104 = vmatprep.subr.mxu0 0.0
  %105 = vmatpush2.msra.mxu0 %v50
  %106 = vmatprep.subr.mxu0 0.0
  %107 = vmatpush2.msra.mxu0 %v49
  %108 = vmatprep.subr.mxu0 0.0
  %109 = vmatpush2.msra.mxu0 %v48
  %110 = vmatprep.subr.mxu0 0.0
  %111 = vmatpush2.msra.mxu0 %v47
  %112 = vmatprep.subr.mxu0 0.0
  %113 = vmatpush2.msra.mxu0 %v46
  %114 = vmatprep.subr.mxu0 0.0
  %115 = vmatpush2.msra.mxu0 %v45
  %116 = vmatprep.subr.mxu0 0.0
  %117 = vmatpush2.msra.mxu0 %v44
  %118 = vmatprep.subr.mxu0 0.0
  %119 = vmatpush2.msra.mxu0 %v43
  %120 = vmatprep.subr.mxu0 0.0
  %121 = vmatpush2.msra.mxu0 %v42
  %122 = vmatprep.subr.mxu0 0.0
  %123 = vmatpush2.msra.mxu0 %v41
  %124 = vmatprep.subr.mxu0 0.0
  %125 = vmatpush2.msra.mxu0 %v40
  %126 = vmatprep.subr.mxu0 0.0
  %127 = vmatpush2.msra.mxu0 %v39
  %128 = vmatprep.mubr.f32.mxu0 %v21
  %129 = vmatmul.mubr.f32.gmra.mxu0 %v20
  %v130 = vpop.f32.mrf.mxu0
  %v131 = vadd.f32 %v59, %v130
  %v132 = vpop.f32.mrf.mxu0
  %133 = vdwg.mxu0
  %134 = vmatprep.subr.mxu0 0.0
  %135 = vmatpush1.msra.mxu0 0.0
  %136 = vmatprep.subr.mxu0 0.0
  %137 = vmatpush1.msra.mxu0 0.0
  %138 = vmatprep.subr.mxu0 0.0
  %139 = vmatpush1.msra.mxu0 0.0
  %140 = vmatprep.subr.mxu0 0.0
  %141 = vmatpush1.msra.mxu0 0.0
  %142 = vmatprep.subr.mxu0 0.0
  %143 = vmatpush1.msra.mxu0 0.0
  %144 = vmatprep.subr.mxu0 0.0
  %145 = vmatpush1.msra.mxu0 0.0
  %146 = vmatprep.subr.mxu0 0.0
  %147 = vmatpush1.msra.mxu0 0.0
  %148 = vmatprep.subr.mxu0 0.0
  %149 = vmatpush1.msra.mxu0 0.0
  %150 = vmatprep.subr.mxu0 0.0
  %151 = vmatpush1.msra.mxu0 0.0
  %152 = vmatprep.subr.mxu0 0.0
  %153 = vmatpush1.msra.mxu0 0.0
  %154 = vmatprep.subr.mxu0 0.0
  %155 = vmatpush1.msra.mxu0 0.0
  %156 = vmatprep.subr.mxu0 0.0
  %157 = vmatpush1.msra.mxu0 0.0
  %158 = vmatprep.subr.mxu0 0.0
  %159 = vmatpush1.msra.mxu0 %v58
  %160 = vmatprep.subr.mxu0 0.0
  %161 = vmatpush1.msra.mxu0 %v57
  %162 = vmatprep.subr.mxu0 0.0
  %163 = vmatpush1.msra.mxu0 %v56
  %164 = vmatprep.subr.mxu0 0.0
  %165 = vmatpush1.msra.mxu0 %v55
  %166 = vmatprep.subr.mxu0 0.0
  %167 = vmatpush2.msra.mxu0 0.0
  %168 = vmatprep.subr.mxu0 0.0
  %169 = vmatpush2.msra.mxu0 0.0
  %170 = vmatprep.subr.mxu0 0.0
  %171 = vmatpush2.msra.mxu0 0.0
  %172 = vmatprep.subr.mxu0 0.0
  %173 = vmatpush2.msra.mxu0 0.0
  %174 = vmatprep.subr.mxu0 0.0
  %175 = vmatpush2.msra.mxu0 0.0
  %176 = vmatprep.subr.mxu0 0.0
  %177 = vmatpush2.msra.mxu0 0.0
  %178 = vmatprep.subr.mxu0 0.0
  %179 = vmatpush2.msra.mxu0 0.0
  %180 = vmatprep.subr.mxu0 0.0
  %181 = vmatpush2.msra.mxu0 0.0
  %182 = vmatprep.subr.mxu0 0.0
  %183 = vmatpush2.msra.mxu0 0.0
  %184 = vmatprep.subr.mxu0 0.0
  %185 = vmatpush2.msra.mxu0 0.0
  %186 = vmatprep.subr.mxu0 0.0
  %187 = vmatpush2.msra.mxu0 0.0
  %188 = vmatprep.subr.mxu0 0.0
  %189 = vmatpush2.msra.mxu0 0.0
  %190 = vmatprep.subr.mxu0 0.0
  %191 = vmatpush2.msra.mxu0 0.0
  %192 = vmatprep.subr.mxu0 0.0
  %193 = vmatpush2.msra.mxu0 0.0
  %194 = vmatprep.subr.mxu0 0.0
  %195 = vmatpush2.msra.mxu0 0.0
  %196 = vmatprep.subr.mxu0 0.0
  %197 = vmatpush2.msra.mxu0 0.0
  %198 = vmatprep.mubr.f32.mxu0 0.0
  %199 = vmatmul.mubr.f32.gmra.mxu0 %v62
  %v200 = vpop.f32.mrf.mxu0
  %v201 = vadd.f32 %v131, %v200
  %v202 = vpop.f32.mrf.mxu0
  %203 = vdwg.mxu0
  %v204 = vld [vmem:[%s3] sm:$0xff]
  %v205 = vld [vmem:[%s3 + $0x8] sm:$0xff]
  %v206 = vld [vmem:[%s3 + $0x10] sm:$0xff]
  %v207 = vld [vmem:[%s3 + $0x18] sm:$0xff]
  %v208 = vld [vmem:[%s3 + $0x20] sm:$0xff]
  %v209 = vld [vmem:[%s3 + $0x28] sm:$0xff]
  %v210 = vld [vmem:[%s3 + $0x30] sm:$0xff]
  %v211 = vld [vmem:[%s3 + $0x38] sm:$0xff]
  %v212 = vld [vmem:[%s3 + $0x40] sm:$0xff]
  %vm213 = vcmask 64512
  %v215 = vsel %vm213, %v204, 0
  %v218 = vsel %vm213, %v205, 0
  %v221 = vsel %vm213, %v206, 0
  %v224 = vsel %vm213, %v207, 0
  %v227 = vsel %vm213, %v208, 0
  %v230 = vsel %vm213, %v209, 0
  %v233 = vsel %vm213, %v210, 0
  %v236 = vsel %vm213, %v211, 0
  %v239 = vsel %vm213, %v212, 0
  %241 = vmatprep.subr.mxu0 0.0
  %242 = vmatpush1.msra.mxu0 0.0
  %243 = vmatprep.subr.mxu0 0.0
  %244 = vmatpush1.msra.mxu0 0.0
  %245 = vmatprep.subr.mxu0 0.0
  %246 = vmatpush1.msra.mxu0 0.0
  %247 = vmatprep.subr.mxu0 0.0
  %248 = vmatpush1.msra.mxu0 0.0
  %249 = vmatprep.subr.mxu0 0.0
  %250 = vmatpush1.msra.mxu0 0.0
  %251 = vmatprep.subr.mxu0 0.0
  %252 = vmatpush1.msra.mxu0 0.0
  %253 = vmatprep.subr.mxu0 0.0
  %254 = vmatpush1.msra.mxu0 0.0
  %255 = vmatprep.subr.mxu0 0.0
  %256 = vmatpush1.msra.mxu0 0.0
  %257 = vmatprep.subr.mxu0 0.0
  %258 = vmatpush1.msra.mxu0 0.0
  %259 = vmatprep.subr.mxu0 0.0
  %260 = vmatpush1.msra.mxu0 0.0
  %261 = vmatprep.subr.mxu0 0.0
  %262 = vmatpush1.msra.mxu0 0.0
  %263 = vmatprep.subr.mxu0 0.0
  %264 = vmatpush1.msra.mxu0 0.0
  %265 = vmatprep.subr.mxu0 0.0
  %266 = vmatpush1.msra.mxu0 0.0
  %267 = vmatprep.subr.mxu0 0.0
  %268 = vmatpush1.msra.mxu0 0.0
  %269 = vmatprep.subr.mxu0 0.0
  %270 = vmatpush1.msra.mxu0 0.0
  %271 = vmatprep.subr.mxu0 0.0
  %272 = vmatpush1.msra.mxu0 %v201
  %273 = vmatprep.subr.mxu0 0.0
  %274 = vmatpush2.msra.mxu0 0.0
  %275 = vmatprep.subr.mxu0 0.0
  %276 = vmatpush2.msra.mxu0 0.0
  %277 = vmatprep.subr.mxu0 0.0
  %278 = vmatpush2.msra.mxu0 0.0
  %279 = vmatprep.subr.mxu0 0.0
  %280 = vmatpush2.msra.mxu0 0.0
  %281 = vmatprep.subr.mxu0 0.0
  %282 = vmatpush2.msra.mxu0 0.0
  %283 = vmatprep.subr.mxu0 0.0
  %284 = vmatpush2.msra.mxu0 0.0
  %285 = vmatprep.subr.mxu0 0.0
  %286 = vmatpush2.msra.mxu0 0.0
  %287 = vmatprep.subr.mxu0 0.0
  %288 = vmatpush2.msra.mxu0 0.0
  %289 = vmatprep.subr.mxu0 0.0
  %290 = vmatpush2.msra.mxu0 0.0
  %291 = vmatprep.subr.mxu0 0.0
  %292 = vmatpush2.msra.mxu0 0.0
  %293 = vmatprep.subr.mxu0 0.0
  %294 = vmatpush2.msra.mxu0 0.0
  %295 = vmatprep.subr.mxu0 0.0
  %296 = vmatpush2.msra.mxu0 0.0
  %297 = vmatprep.subr.mxu0 0.0
  %298 = vmatpush2.msra.mxu0 0.0
  %299 = vmatprep.subr.mxu0 0.0
  %300 = vmatpush2.msra.mxu0 0.0
  %301 = vmatprep.subr.mxu0 0.0
  %302 = vmatpush2.msra.mxu0 0.0
  %303 = vmatprep.subr.mxu0 0.0
  %304 = vmatpush2.msra.mxu0 0.0
  %305 = vmatprep.mubr.f32.mxu0 0.0
  %306 = vmatmul.mubr.f32.gmra.mxu0 %v215
  %v307 = vpop.f32.mrf.mxu0
  %v308 = vadd.f32 0.0, %v307
  %v309 = vpop.f32.mrf.mxu0
  %310 = vmatprep.mubr.f32.mxu0 0.0
  %311 = vmatmul.mubr.f32.gmra.mxu0 %v218
  %v312 = vpop.f32.mrf.mxu0
  %v313 = vadd.f32 0.0, %v312
  %v314 = vpop.f32.mrf.mxu0
  %315 = vmatprep.mubr.f32.mxu0 0.0
  %316 = vmatmul.mubr.f32.gmra.mxu0 %v221
  %v317 = vpop.f32.mrf.mxu0
  %v318 = vadd.f32 0.0, %v317
  %v319 = vpop.f32.mrf.mxu0
  %320 = vmatprep.mubr.f32.mxu0 0.0
  %321 = vmatmul.mubr.f32.gmra.mxu0 %v224
  %v322 = vpop.f32.mrf.mxu0
  %v323 = vadd.f32 0.0, %v322
  %v324 = vpop.f32.mrf.mxu0
  %325 = vmatprep.mubr.f32.mxu0 0.0
  %326 = vmatmul.mubr.f32.gmra.mxu0 %v227
  %v327 = vpop.f32.mrf.mxu0
  %v328 = vadd.f32 0.0, %v327
  %v329 = vpop.f32.mrf.mxu0
  %330 = vmatprep.mubr.f32.mxu0 0.0
  %331 = vmatmul.mubr.f32.gmra.mxu0 %v230
  %v332 = vpop.f32.mrf.mxu0
  %v333 = vadd.f32 0.0, %v332
  %v334 = vpop.f32.mrf.mxu0
  %335 = vmatprep.mubr.f32.mxu0 0.0
  %336 = vmatmul.mubr.f32.gmra.mxu0 %v233
  %v337 = vpop.f32.mrf.mxu0
  %v338 = vadd.f32 0.0, %v337
  %v339 = vpop.f32.mrf.mxu0
  %340 = vmatprep.mubr.f32.mxu0 0.0
  %341 = vmatmul.mubr.f32.gmra.mxu0 %v236
  %v342 = vpop.f32.mrf.mxu0
  %v343 = vadd.f32 0.0, %v342
  %v344 = vpop.f32.mrf.mxu0
  %345 = vmatprep.mubr.f32.mxu0 0.0
  %346 = vmatmul.mubr.f32.gmra.mxu0 %v239
  %v347 = vpop.f32.mrf.mxu0
  %v348 = vadd.f32 0.0, %v347
  %v349 = vpop.f32.mrf.mxu0
  %350 = vdwg.mxu0
  %v351 = vld [vmem:[%s1] sm:$0xf]
  %v352 = vld [vmem:[%s1 + $0x4] sm:$0xf]
  %v353 = vld [vmem:[%s1 + $0x8] sm:$0xf]
  %v354 = vld [vmem:[%s1 + $0xc] sm:$0xf]
  %v355 = vld [vmem:[%s1 + $0x10] sm:$0xf]
  %v356 = vld [vmem:[%s1 + $0x14] sm:$0xf]
  %v357 = vld [vmem:[%s1 + $0x18] sm:$0xf]
  %v358 = vld [vmem:[%s1 + $0x1c] sm:$0xf]
  %v359 = vld [vmem:[%s1 + $0x20] sm:$0xf]
  %v360 = vld [vmem:[%s1 + $0x24] sm:$0xf]
  %v361 = vld [vmem:[%s1 + $0x28] sm:$0xf]
  %v362 = vld [vmem:[%s1 + $0x2c] sm:$0xf]
  %v363 = vld [vmem:[%s1 + $0x30] sm:$0xf]
  %v364 = vld [vmem:[%s1 + $0x34] sm:$0xf]
  %v365 = vld [vmem:[%s1 + $0x38] sm:$0xf]
  %v366 = vld [vmem:[%s1 + $0x3c] sm:$0xf]
  %v367 = vunpack.c.l.bf16 %v351
  %v368 = vunpack.c.l.bf16 %v352
  %v369 = vunpack.c.l.bf16 %v353
  %v370 = vunpack.c.l.bf16 %v354
  %v371 = vunpack.c.l.bf16 %v355
  %v372 = vunpack.c.l.bf16 %v356
  %v373 = vunpack.c.l.bf16 %v357
  %v374 = vunpack.c.l.bf16 %v358
  %v375 = vunpack.c.l.bf16 %v359
  %v376 = vunpack.c.l.bf16 %v360
  %v377 = vunpack.c.l.bf16 %v361
  %v378 = vunpack.c.l.bf16 %v362
  %v379 = vunpack.c.l.bf16 %v363
  %v380 = vunpack.c.l.bf16 %v364
  %v381 = vunpack.c.l.bf16 %v365
  %v382 = vunpack.c.l.bf16 %v366
  %s383 = scalar_lea.vmem %s1, 64
  %v384 = vld [vmem:[%s383] sm:$0xf]
  %v385 = vld [vmem:[%s383 + $0x4] sm:$0xf]
  %v386 = vld [vmem:[%s383 + $0x8] sm:$0xf]
  %v387 = vld [vmem:[%s383 + $0xc] sm:$0xf]
  %v388 = vld [vmem:[%s383 + $0x10] sm:$0xf]
  %v389 = vld [vmem:[%s383 + $0x14] sm:$0xf]
  %v390 = vld [vmem:[%s383 + $0x18] sm:$0xf]
  %v391 = vld [vmem:[%s383 + $0x1c] sm:$0xf]
  %v392 = vld [vmem:[%s383 + $0x20] sm:$0xf]
  %v393 = vld [vmem:[%s383 + $0x24] sm:$0xf]
  %v394 = vld [vmem:[%s383 + $0x28] sm:$0xf]
  %v395 = vld [vmem:[%s383 + $0x2c] sm:$0xf]
  %v396 = vld [vmem:[%s383 + $0x30] sm:$0xf]
  %v397 = vld [vmem:[%s383 + $0x34] sm:$0xf]
  %v398 = vld [vmem:[%s383 + $0x38] sm:$0xf]
  %v399 = vld [vmem:[%s383 + $0x3c] sm:$0xf]
  %v400 = vunpack.c.l.bf16 %v384
  %v401 = vunpack.c.l.bf16 %v385
  %v402 = vunpack.c.l.bf16 %v386
  %v403 = vunpack.c.l.bf16 %v387
  %v404 = vunpack.c.l.bf16 %v388
  %v405 = vunpack.c.l.bf16 %v389
  %v406 = vunpack.c.l.bf16 %v390
  %v407 = vunpack.c.l.bf16 %v391
  %v408 = vunpack.c.l.bf16 %v392
  %v409 = vunpack.c.l.bf16 %v393
  %v410 = vunpack.c.l.bf16 %v394
  %v411 = vunpack.c.l.bf16 %v395
  %v412 = vunpack.c.l.bf16 %v396
  %v413 = vunpack.c.l.bf16 %v397
  %v414 = vunpack.c.l.bf16 %v398
  %v415 = vunpack.c.l.bf16 %v399
  %416 = vmatprep.subr.mxu0 0.0
  %417 = vmatpush1.msra.mxu0 %v415
  %418 = vmatprep.subr.mxu0 0.0
  %419 = vmatpush1.msra.mxu0 %v414
  %420 = vmatprep.subr.mxu0 0.0
  %421 = vmatpush1.msra.mxu0 %v413
  %422 = vmatprep.subr.mxu0 0.0
  %423 = vmatpush1.msra.mxu0 %v412
  %424 = vmatprep.subr.mxu0 0.0
  %425 = vmatpush1.msra.mxu0 %v411
  %426 = vmatprep.subr.mxu0 0.0
  %427 = vmatpush1.msra.mxu0 %v410
  %428 = vmatprep.subr.mxu0 0.0
  %429 = vmatpush1.msra.mxu0 %v409
  %430 = vmatprep.subr.mxu0 0.0
  %431 = vmatpush1.msra.mxu0 %v408
  %432 = vmatprep.subr.mxu0 0.0
  %433 = vmatpush1.msra.mxu0 %v407
  %434 = vmatprep.subr.mxu0 0.0
  %435 = vmatpush1.msra.mxu0 %v406
  %436 = vmatprep.subr.mxu0 0.0
  %437 = vmatpush1.msra.mxu0 %v405
  %438 = vmatprep.subr.mxu0 0.0
  %439 = vmatpush1.msra.mxu0 %v404
  %440 = vmatprep.subr.mxu0 0.0
  %441 = vmatpush1.msra.mxu0 %v403
  %442 = vmatprep.subr.mxu0 0.0
  %443 = vmatpush1.msra.mxu0 %v402
  %444 = vmatprep.subr.mxu0 0.0
  %445 = vmatpush1.msra.mxu0 %v401
  %446 = vmatprep.subr.mxu0 0.0
  %447 = vmatpush1.msra.mxu0 %v400
  %448 = vmatprep.subr.mxu0 0.0
  %449 = vmatpush2.msra.mxu0 0.0
  %450 = vmatprep.subr.mxu0 0.0
  %451 = vmatpush2.msra.mxu0 0.0
  %452 = vmatprep.subr.mxu0 0.0
  %453 = vmatpush2.msra.mxu0 0.0
  %454 = vmatprep.subr.mxu0 0.0
  %455 = vmatpush2.msra.mxu0 0.0
  %456 = vmatprep.subr.mxu0 0.0
  %457 = vmatpush2.msra.mxu0 0.0
  %458 = vmatprep.subr.mxu0 0.0
  %459 = vmatpush2.msra.mxu0 0.0
  %460 = vmatprep.subr.mxu0 0.0
  %461 = vmatpush2.msra.mxu0 0.0
  %462 = vmatprep.subr.mxu0 0.0
  %463 = vmatpush2.msra.mxu0 0.0
  %464 = vmatprep.subr.mxu0 0.0
  %465 = vmatpush2.msra.mxu0 0.0
  %466 = vmatprep.subr.mxu0 0.0
  %467 = vmatpush2.msra.mxu0 0.0
  %468 = vmatprep.subr.mxu0 0.0
  %469 = vmatpush2.msra.mxu0 0.0
  %470 = vmatprep.subr.mxu0 0.0
  %471 = vmatpush2.msra.mxu0 0.0
  %472 = vmatprep.subr.mxu0 0.0
  %473 = vmatpush2.msra.mxu0 0.0
  %474 = vmatprep.subr.mxu0 0.0
  %475 = vmatpush2.msra.mxu0 0.0
  %476 = vmatprep.subr.mxu0 0.0
  %477 = vmatpush2.msra.mxu0 0.0
  %478 = vmatprep.subr.mxu0 0.0
  %479 = vmatpush2.msra.mxu0 0.0
  %480 = vmatprep.mubr.f32.mxu0 0.0
  %481 = vmatmul.mubr.f32.gmra.mxu0 %v313
  %v482 = vpop.f32.mrf.mxu0
  %v483 = vadd.f32 0.0, %v482
  %v484 = vpop.f32.mrf.mxu0
  %485 = vdwg.mxu0
  %486 = vmatprep.subr.mxu0 0.0
  %487 = vmatpush1.msra.mxu0 %v382
  %488 = vmatprep.subr.mxu0 0.0
  %489 = vmatpush1.msra.mxu0 %v381
  %490 = vmatprep.subr.mxu0 0.0
  %491 = vmatpush1.msra.mxu0 %v380
  %492 = vmatprep.subr.mxu0 0.0
  %493 = vmatpush1.msra.mxu0 %v379
  %494 = vmatprep.subr.mxu0 0.0
  %495 = vmatpush1.msra.mxu0 %v378
  %496 = vmatprep.subr.mxu0 0.0
  %497 = vmatpush1.msra.mxu0 %v377
  %498 = vmatprep.subr.mxu0 0.0
  %499 = vmatpush1.msra.mxu0 %v376
  %500 = vmatprep.subr.mxu0 0.0
  %501 = vmatpush1.msra.mxu0 %v375
  %502 = vmatprep.subr.mxu0 0.0
  %503 = vmatpush1.msra.mxu0 %v374
  %504 = vmatprep.subr.mxu0 0.0
  %505 = vmatpush1.msra.mxu0 %v373
  %506 = vmatprep.subr.mxu0 0.0
  %507 = vmatpush1.msra.mxu0 %v372
  %508 = vmatprep.subr.mxu0 0.0
  %509 = vmatpush1.msra.mxu0 %v371
  %510 = vmatprep.subr.mxu0 0.0
  %511 = vmatpush1.msra.mxu0 %v370
  %512 = vmatprep.subr.mxu0 0.0
  %513 = vmatpush1.msra.mxu0 %v369
  %514 = vmatprep.subr.mxu0 0.0
  %515 = vmatpush1.msra.mxu0 %v368
  %516 = vmatprep.subr.mxu0 0.0
  %517 = vmatpush1.msra.mxu0 %v367
  %518 = vmatprep.subr.mxu0 0.0
  %519 = vmatpush2.msra.mxu0 0.0
  %520 = vmatprep.subr.mxu0 0.0
  %521 = vmatpush2.msra.mxu0 0.0
  %522 = vmatprep.subr.mxu0 0.0
  %523 = vmatpush2.msra.mxu0 0.0
  %524 = vmatprep.subr.mxu0 0.0
  %525 = vmatpush2.msra.mxu0 0.0
  %526 = vmatprep.subr.mxu0 0.0
  %527 = vmatpush2.msra.mxu0 0.0
  %528 = vmatprep.subr.mxu0 0.0
  %529 = vmatpush2.msra.mxu0 0.0
  %530 = vmatprep.subr.mxu0 0.0
  %531 = vmatpush2.msra.mxu0 0.0
  %532 = vmatprep.subr.mxu0 0.0
  %533 = vmatpush2.msra.mxu0 0.0
  %534 = vmatprep.subr.mxu0 0.0
  %535 = vmatpush2.msra.mxu0 0.0
  %536 = vmatprep.subr.mxu0 0.0
  %537 = vmatpush2.msra.mxu0 0.0
  %538 = vmatprep.subr.mxu0 0.0
  %539 = vmatpush2.msra.mxu0 0.0
  %540 = vmatprep.subr.mxu0 0.0
  %541 = vmatpush2.msra.mxu0 0.0
  %542 = vmatprep.subr.mxu0 0.0
  %543 = vmatpush2.msra.mxu0 0.0
  %544 = vmatprep.subr.mxu0 0.0
  %545 = vmatpush2.msra.mxu0 0.0
  %546 = vmatprep.subr.mxu0 0.0
  %547 = vmatpush2.msra.mxu0 0.0
  %548 = vmatprep.subr.mxu0 0.0
  %549 = vmatpush2.msra.mxu0 0.0
  %550 = vmatprep.mubr.f32.mxu0 0.0
  %551 = vmatmul.mubr.f32.gmra.mxu0 %v308
  %v552 = vpop.f32.mrf.mxu0
  %v553 = vadd.f32 %v483, %v552
  %v554 = vpop.f32.mrf.mxu0
  %555 = vdwg.mxu0
  %s556 = scalar_lea.vmem %s1, 128
  %v557 = vld [vmem:[%s556] sm:$0xf]
  %v558 = vld [vmem:[%s556 + $0x4] sm:$0xf]
  %v559 = vld [vmem:[%s556 + $0x8] sm:$0xf]
  %v560 = vld [vmem:[%s556 + $0xc] sm:$0xf]
  %v561 = vld [vmem:[%s556 + $0x10] sm:$0xf]
  %v562 = vld [vmem:[%s556 + $0x14] sm:$0xf]
  %v563 = vld [vmem:[%s556 + $0x18] sm:$0xf]
  %v564 = vld [vmem:[%s556 + $0x1c] sm:$0xf]
  %v565 = vld [vmem:[%s556 + $0x20] sm:$0xf]
  %v566 = vld [vmem:[%s556 + $0x24] sm:$0xf]
  %v567 = vld [vmem:[%s556 + $0x28] sm:$0xf]
  %v568 = vld [vmem:[%s556 + $0x2c] sm:$0xf]
  %v569 = vld [vmem:[%s556 + $0x30] sm:$0xf]
  %v570 = vld [vmem:[%s556 + $0x34] sm:$0xf]
  %v571 = vld [vmem:[%s556 + $0x38] sm:$0xf]
  %v572 = vld [vmem:[%s556 + $0x3c] sm:$0xf]
  %v573 = vunpack.c.l.bf16 %v557
  %v574 = vunpack.c.l.bf16 %v558
  %v575 = vunpack.c.l.bf16 %v559
  %v576 = vunpack.c.l.bf16 %v560
  %v577 = vunpack.c.l.bf16 %v561
  %v578 = vunpack.c.l.bf16 %v562
  %v579 = vunpack.c.l.bf16 %v563
  %v580 = vunpack.c.l.bf16 %v564
  %v581 = vunpack.c.l.bf16 %v565
  %v582 = vunpack.c.l.bf16 %v566
  %v583 = vunpack.c.l.bf16 %v567
  %v584 = vunpack.c.l.bf16 %v568
  %v585 = vunpack.c.l.bf16 %v569
  %v586 = vunpack.c.l.bf16 %v570
  %v587 = vunpack.c.l.bf16 %v571
  %v588 = vunpack.c.l.bf16 %v572
  %589 = vmatprep.subr.mxu0 0.0
  %590 = vmatpush1.msra.mxu0 %v588
  %591 = vmatprep.subr.mxu0 0.0
  %592 = vmatpush1.msra.mxu0 %v587
  %593 = vmatprep.subr.mxu0 0.0
  %594 = vmatpush1.msra.mxu0 %v586
  %595 = vmatprep.subr.mxu0 0.0
  %596 = vmatpush1.msra.mxu0 %v585
  %597 = vmatprep.subr.mxu0 0.0
  %598 = vmatpush1.msra.mxu0 %v584
  %599 = vmatprep.subr.mxu0 0.0
  %600 = vmatpush1.msra.mxu0 %v583
  %601 = vmatprep.subr.mxu0 0.0
  %602 = vmatpush1.msra.mxu0 %v582
  %603 = vmatprep.subr.mxu0 0.0
  %604 = vmatpush1.msra.mxu0 %v581
  %605 = vmatprep.subr.mxu0 0.0
  %606 = vmatpush1.msra.mxu0 %v580
  %607 = vmatprep.subr.mxu0 0.0
  %608 = vmatpush1.msra.mxu0 %v579
  %609 = vmatprep.subr.mxu0 0.0
  %610 = vmatpush1.msra.mxu0 %v578
  %611 = vmatprep.subr.mxu0 0.0
  %612 = vmatpush1.msra.mxu0 %v577
  %613 = vmatprep.subr.mxu0 0.0
  %614 = vmatpush1.msra.mxu0 %v576
  %615 = vmatprep.subr.mxu0 0.0
  %616 = vmatpush1.msra.mxu0 %v575
  %617 = vmatprep.subr.mxu0 0.0
  %618 = vmatpush1.msra.mxu0 %v574
  %619 = vmatprep.subr.mxu0 0.0
  %620 = vmatpush1.msra.mxu0 %v573
  %621 = vmatprep.subr.mxu0 0.0
  %622 = vmatpush2.msra.mxu0 0.0
  %623 = vmatprep.subr.mxu0 0.0
  %624 = vmatpush2.msra.mxu0 0.0
  %625 = vmatprep.subr.mxu0 0.0
  %626 = vmatpush2.msra.mxu0 0.0
  %627 = vmatprep.subr.mxu0 0.0
  %628 = vmatpush2.msra.mxu0 0.0
  %629 = vmatprep.subr.mxu0 0.0
  %630 = vmatpush2.msra.mxu0 0.0
  %631 = vmatprep.subr.mxu0 0.0
  %632 = vmatpush2.msra.mxu0 0.0
  %633 = vmatprep.subr.mxu0 0.0
  %634 = vmatpush2.msra.mxu0 0.0
  %635 = vmatprep.subr.mxu0 0.0
  %636 = vmatpush2.msra.mxu0 0.0
  %637 = vmatprep.subr.mxu0 0.0
  %638 = vmatpush2.msra.mxu0 0.0
  %639 = vmatprep.subr.mxu0 0.0
  %640 = vmatpush2.msra.mxu0 0.0
  %641 = vmatprep.subr.mxu0 0.0
  %642 = vmatpush2.msra.mxu0 0.0
  %643 = vmatprep.subr.mxu0 0.0
  %644 = vmatpush2.msra.mxu0 0.0
  %645 = vmatprep.subr.mxu0 0.0
  %646 = vmatpush2.msra.mxu0 0.0
  %647 = vmatprep.subr.mxu0 0.0
  %648 = vmatpush2.msra.mxu0 0.0
  %649 = vmatprep.subr.mxu0 0.0
  %650 = vmatpush2.msra.mxu0 0.0
  %651 = vmatprep.subr.mxu0 0.0
  %652 = vmatpush2.msra.mxu0 0.0
  %653 = vmatprep.mubr.f32.mxu0 0.0
  %654 = vmatmul.mubr.f32.gmra.mxu0 %v318
  %v655 = vpop.f32.mrf.mxu0
  %v656 = vadd.f32 0.0, %v655
  %v657 = vpop.f32.mrf.mxu0
  %658 = vdwg.mxu0
  %v659 = vadd.f32 %v553, %v656
  %s660 = scalar_lea.vmem %s1, 192
  %v661 = vld [vmem:[%s660] sm:$0xf]
  %v662 = vld [vmem:[%s660 + $0x4] sm:$0xf]
  %v663 = vld [vmem:[%s660 + $0x8] sm:$0xf]
  %v664 = vld [vmem:[%s660 + $0xc] sm:$0xf]
  %v665 = vld [vmem:[%s660 + $0x10] sm:$0xf]
  %v666 = vld [vmem:[%s660 + $0x14] sm:$0xf]
  %v667 = vld [vmem:[%s660 + $0x18] sm:$0xf]
  %v668 = vld [vmem:[%s660 + $0x1c] sm:$0xf]
  %v669 = vld [vmem:[%s660 + $0x20] sm:$0xf]
  %v670 = vld [vmem:[%s660 + $0x24] sm:$0xf]
  %v671 = vld [vmem:[%s660 + $0x28] sm:$0xf]
  %v672 = vld [vmem:[%s660 + $0x2c] sm:$0xf]
  %v673 = vld [vmem:[%s660 + $0x30] sm:$0xf]
  %v674 = vld [vmem:[%s660 + $0x34] sm:$0xf]
  %v675 = vld [vmem:[%s660 + $0x38] sm:$0xf]
  %v676 = vld [vmem:[%s660 + $0x3c] sm:$0xf]
  %v677 = vunpack.c.l.bf16 %v661
  %v678 = vunpack.c.l.bf16 %v662
  %v679 = vunpack.c.l.bf16 %v663
  %v680 = vunpack.c.l.bf16 %v664
  %v681 = vunpack.c.l.bf16 %v665
  %v682 = vunpack.c.l.bf16 %v666
  %v683 = vunpack.c.l.bf16 %v667
  %v684 = vunpack.c.l.bf16 %v668
  %v685 = vunpack.c.l.bf16 %v669
  %v686 = vunpack.c.l.bf16 %v670
  %v687 = vunpack.c.l.bf16 %v671
  %v688 = vunpack.c.l.bf16 %v672
  %v689 = vunpack.c.l.bf16 %v673
  %v690 = vunpack.c.l.bf16 %v674
  %v691 = vunpack.c.l.bf16 %v675
  %v692 = vunpack.c.l.bf16 %v676
  %693 = vmatprep.subr.mxu0 0.0
  %694 = vmatpush1.msra.mxu0 %v692
  %695 = vmatprep.subr.mxu0 0.0
  %696 = vmatpush1.msra.mxu0 %v691
  %697 = vmatprep.subr.mxu0 0.0
  %698 = vmatpush1.msra.mxu0 %v690
  %699 = vmatprep.subr.mxu0 0.0
  %700 = vmatpush1.msra.mxu0 %v689
  %701 = vmatprep.subr.mxu0 0.0
  %702 = vmatpush1.msra.mxu0 %v688
  %703 = vmatprep.subr.mxu0 0.0
  %704 = vmatpush1.msra.mxu0 %v687
  %705 = vmatprep.subr.mxu0 0.0
  %706 = vmatpush1.msra.mxu0 %v686
  %707 = vmatprep.subr.mxu0 0.0
  %708 = vmatpush1.msra.mxu0 %v685
  %709 = vmatprep.subr.mxu0 0.0
  %710 = vmatpush1.msra.mxu0 %v684
  %711 = vmatprep.subr.mxu0 0.0
  %712 = vmatpush1.msra.mxu0 %v683
  %713 = vmatprep.subr.mxu0 0.0
  %714 = vmatpush1.msra.mxu0 %v682
  %715 = vmatprep.subr.mxu0 0.0
  %716 = vmatpush1.msra.mxu0 %v681
  %717 = vmatprep.subr.mxu0 0.0
  %718 = vmatpush1.msra.mxu0 %v680
  %719 = vmatprep.subr.mxu0 0.0
  %720 = vmatpush1.msra.mxu0 %v679
  %721 = vmatprep.subr.mxu0 0.0
  %722 = vmatpush1.msra.mxu0 %v678
  %723 = vmatprep.subr.mxu0 0.0
  %724 = vmatpush1.msra.mxu0 %v677
  %725 = vmatprep.subr.mxu0 0.0
  %726 = vmatpush2.msra.mxu0 0.0
  %727 = vmatprep.subr.mxu0 0.0
  %728 = vmatpush2.msra.mxu0 0.0
  %729 = vmatprep.subr.mxu0 0.0
  %730 = vmatpush2.msra.mxu0 0.0
  %731 = vmatprep.subr.mxu0 0.0
  %732 = vmatpush2.msra.mxu0 0.0
  %733 = vmatprep.subr.mxu0 0.0
  %734 = vmatpush2.msra.mxu0 0.0
  %735 = vmatprep.subr.mxu0 0.0
  %736 = vmatpush2.msra.mxu0 0.0
  %737 = vmatprep.subr.mxu0 0.0
  %738 = vmatpush2.msra.mxu0 0.0
  %739 = vmatprep.subr.mxu0 0.0
  %740 = vmatpush2.msra.mxu0 0.0
  %741 = vmatprep.subr.mxu0 0.0
  %742 = vmatpush2.msra.mxu0 0.0
  %743 = vmatprep.subr.mxu0 0.0
  %744 = vmatpush2.msra.mxu0 0.0
  %745 = vmatprep.subr.mxu0 0.0
  %746 = vmatpush2.msra.mxu0 0.0
  %747 = vmatprep.subr.mxu0 0.0
  %748 = vmatpush2.msra.mxu0 0.0
  %749 = vmatprep.subr.mxu0 0.0
  %750 = vmatpush2.msra.mxu0 0.0
  %751 = vmatprep.subr.mxu0 0.0
  %752 = vmatpush2.msra.mxu0 0.0
  %753 = vmatprep.subr.mxu0 0.0
  %754 = vmatpush2.msra.mxu0 0.0
  %755 = vmatprep.subr.mxu0 0.0
  %756 = vmatpush2.msra.mxu0 0.0
  %757 = vmatprep.mubr.f32.mxu0 0.0
  %758 = vmatmul.mubr.f32.gmra.mxu0 %v323
  %v759 = vpop.f32.mrf.mxu0
  %v760 = vadd.f32 0.0, %v759
  %v761 = vpop.f32.mrf.mxu0
  %762 = vdwg.mxu0
  %v763 = vadd.f32 %v659, %v760
  %s764 = scalar_lea.vmem %s1, 256
  %v765 = vld [vmem:[%s764] sm:$0xf]
  %v766 = vld [vmem:[%s764 + $0x4] sm:$0xf]
  %v767 = vld [vmem:[%s764 + $0x8] sm:$0xf]
  %v768 = vld [vmem:[%s764 + $0xc] sm:$0xf]
  %v769 = vld [vmem:[%s764 + $0x10] sm:$0xf]
  %v770 = vld [vmem:[%s764 + $0x14] sm:$0xf]
  %v771 = vld [vmem:[%s764 + $0x18] sm:$0xf]
  %v772 = vld [vmem:[%s764 + $0x1c] sm:$0xf]
  %v773 = vld [vmem:[%s764 + $0x20] sm:$0xf]
  %v774 = vld [vmem:[%s764 + $0x24] sm:$0xf]
  %v775 = vld [vmem:[%s764 + $0x28] sm:$0xf]
  %v776 = vld [vmem:[%s764 + $0x2c] sm:$0xf]
  %v777 = vld [vmem:[%s764 + $0x30] sm:$0xf]
  %v778 = vld [vmem:[%s764 + $0x34] sm:$0xf]
  %v779 = vld [vmem:[%s764 + $0x38] sm:$0xf]
  %v780 = vld [vmem:[%s764 + $0x3c] sm:$0xf]
  %v781 = vunpack.c.l.bf16 %v765
  %v782 = vunpack.c.l.bf16 %v766
  %v783 = vunpack.c.l.bf16 %v767
  %v784 = vunpack.c.l.bf16 %v768
  %v785 = vunpack.c.l.bf16 %v769
  %v786 = vunpack.c.l.bf16 %v770
  %v787 = vunpack.c.l.bf16 %v771
  %v788 = vunpack.c.l.bf16 %v772
  %v789 = vunpack.c.l.bf16 %v773
  %v790 = vunpack.c.l.bf16 %v774
  %v791 = vunpack.c.l.bf16 %v775
  %v792 = vunpack.c.l.bf16 %v776
  %v793 = vunpack.c.l.bf16 %v777
  %v794 = vunpack.c.l.bf16 %v778
  %v795 = vunpack.c.l.bf16 %v779
  %v796 = vunpack.c.l.bf16 %v780
  %797 = vmatprep.subr.mxu0 0.0
  %798 = vmatpush1.msra.mxu0 %v796
  %799 = vmatprep.subr.mxu0 0.0
  %800 = vmatpush1.msra.mxu0 %v795
  %801 = vmatprep.subr.mxu0 0.0
  %802 = vmatpush1.msra.mxu0 %v794
  %803 = vmatprep.subr.mxu0 0.0
  %804 = vmatpush1.msra.mxu0 %v793
  %805 = vmatprep.subr.mxu0 0.0
  %806 = vmatpush1.msra.mxu0 %v792
  %807 = vmatprep.subr.mxu0 0.0
  %808 = vmatpush1.msra.mxu0 %v791
  %809 = vmatprep.subr.mxu0 0.0
  %810 = vmatpush1.msra.mxu0 %v790
  %811 = vmatprep.subr.mxu0 0.0
  %812 = vmatpush1.msra.mxu0 %v789
  %813 = vmatprep.subr.mxu0 0.0
  %814 = vmatpush1.msra.mxu0 %v788
  %815 = vmatprep.subr.mxu0 0.0
  %816 = vmatpush1.msra.mxu0 %v787
  %817 = vmatprep.subr.mxu0 0.0
  %818 = vmatpush1.msra.mxu0 %v786
  %819 = vmatprep.subr.mxu0 0.0
  %820 = vmatpush1.msra.mxu0 %v785
  %821 = vmatprep.subr.mxu0 0.0
  %822 = vmatpush1.msra.mxu0 %v784
  %823 = vmatprep.subr.mxu0 0.0
  %824 = vmatpush1.msra.mxu0 %v783
  %825 = vmatprep.subr.mxu0 0.0
  %826 = vmatpush1.msra.mxu0 %v782
  %827 = vmatprep.subr.mxu0 0.0
  %828 = vmatpush1.msra.mxu0 %v781
  %829 = vmatprep.subr.mxu0 0.0
  %830 = vmatpush2.msra.mxu0 0.0
  %831 = vmatprep.subr.mxu0 0.0
  %832 = vmatpush2.msra.mxu0 0.0
  %833 = vmatprep.subr.mxu0 0.0
  %834 = vmatpush2.msra.mxu0 0.0
  %835 = vmatprep.subr.mxu0 0.0
  %836 = vmatpush2.msra.mxu0 0.0
  %837 = vmatprep.subr.mxu0 0.0
  %838 = vmatpush2.msra.mxu0 0.0
  %839 = vmatprep.subr.mxu0 0.0
  %840 = vmatpush2.msra.mxu0 0.0
  %841 = vmatprep.subr.mxu0 0.0
  %842 = vmatpush2.msra.mxu0 0.0
  %843 = vmatprep.subr.mxu0 0.0
  %844 = vmatpush2.msra.mxu0 0.0
  %845 = vmatprep.subr.mxu0 0.0
  %846 = vmatpush2.msra.mxu0 0.0
  %847 = vmatprep.subr.mxu0 0.0
  %848 = vmatpush2.msra.mxu0 0.0
  %849 = vmatprep.subr.mxu0 0.0
  %850 = vmatpush2.msra.mxu0 0.0
  %851 = vmatprep.subr.mxu0 0.0
  %852 = vmatpush2.msra.mxu0 0.0
  %853 = vmatprep.subr.mxu0 0.0
  %854 = vmatpush2.msra.mxu0 0.0
  %855 = vmatprep.subr.mxu0 0.0
  %856 = vmatpush2.msra.mxu0 0.0
  %857 = vmatprep.subr.mxu0 0.0
  %858 = vmatpush2.msra.mxu0 0.0
  %859 = vmatprep.subr.mxu0 0.0
  %860 = vmatpush2.msra.mxu0 0.0
  %861 = vmatprep.mubr.f32.mxu0 0.0
  %862 = vmatmul.mubr.f32.gmra.mxu0 %v328
  %v863 = vpop.f32.mrf.mxu0
  %v864 = vadd.f32 0.0, %v863
  %v865 = vpop.f32.mrf.mxu0
  %866 = vdwg.mxu0
  %v867 = vadd.f32 %v763, %v864
  %s868 = scalar_lea.vmem %s1, 320
  %v869 = vld [vmem:[%s868] sm:$0xf]
  %v870 = vld [vmem:[%s868 + $0x4] sm:$0xf]
  %v871 = vld [vmem:[%s868 + $0x8] sm:$0xf]
  %v872 = vld [vmem:[%s868 + $0xc] sm:$0xf]
  %v873 = vld [vmem:[%s868 + $0x10] sm:$0xf]
  %v874 = vld [vmem:[%s868 + $0x14] sm:$0xf]
  %v875 = vld [vmem:[%s868 + $0x18] sm:$0xf]
  %v876 = vld [vmem:[%s868 + $0x1c] sm:$0xf]
  %v877 = vld [vmem:[%s868 + $0x20] sm:$0xf]
  %v878 = vld [vmem:[%s868 + $0x24] sm:$0xf]
  %v879 = vld [vmem:[%s868 + $0x28] sm:$0xf]
  %v880 = vld [vmem:[%s868 + $0x2c] sm:$0xf]
  %v881 = vld [vmem:[%s868 + $0x30] sm:$0xf]
  %v882 = vld [vmem:[%s868 + $0x34] sm:$0xf]
  %v883 = vld [vmem:[%s868 + $0x38] sm:$0xf]
  %v884 = vld [vmem:[%s868 + $0x3c] sm:$0xf]
  %v885 = vunpack.c.l.bf16 %v869
  %v886 = vunpack.c.l.bf16 %v870
  %v887 = vunpack.c.l.bf16 %v871
  %v888 = vunpack.c.l.bf16 %v872
  %v889 = vunpack.c.l.bf16 %v873
  %v890 = vunpack.c.l.bf16 %v874
  %v891 = vunpack.c.l.bf16 %v875
  %v892 = vunpack.c.l.bf16 %v876
  %v893 = vunpack.c.l.bf16 %v877
  %v894 = vunpack.c.l.bf16 %v878
  %v895 = vunpack.c.l.bf16 %v879
  %v896 = vunpack.c.l.bf16 %v880
  %v897 = vunpack.c.l.bf16 %v881
  %v898 = vunpack.c.l.bf16 %v882
  %v899 = vunpack.c.l.bf16 %v883
  %v900 = vunpack.c.l.bf16 %v884
  %901 = vmatprep.subr.mxu0 0.0
  %902 = vmatpush1.msra.mxu0 %v900
  %903 = vmatprep.subr.mxu0 0.0
  %904 = vmatpush1.msra.mxu0 %v899
  %905 = vmatprep.subr.mxu0 0.0
  %906 = vmatpush1.msra.mxu0 %v898
  %907 = vmatprep.subr.mxu0 0.0
  %908 = vmatpush1.msra.mxu0 %v897
  %909 = vmatprep.subr.mxu0 0.0
  %910 = vmatpush1.msra.mxu0 %v896
  %911 = vmatprep.subr.mxu0 0.0
  %912 = vmatpush1.msra.mxu0 %v895
  %913 = vmatprep.subr.mxu0 0.0
  %914 = vmatpush1.msra.mxu0 %v894
  %915 = vmatprep.subr.mxu0 0.0
  %916 = vmatpush1.msra.mxu0 %v893
  %917 = vmatprep.subr.mxu0 0.0
  %918 = vmatpush1.msra.mxu0 %v892
  %919 = vmatprep.subr.mxu0 0.0
  %920 = vmatpush1.msra.mxu0 %v891
  %921 = vmatprep.subr.mxu0 0.0
  %922 = vmatpush1.msra.mxu0 %v890
  %923 = vmatprep.subr.mxu0 0.0
  %924 = vmatpush1.msra.mxu0 %v889
  %925 = vmatprep.subr.mxu0 0.0
  %926 = vmatpush1.msra.mxu0 %v888
  %927 = vmatprep.subr.mxu0 0.0
  %928 = vmatpush1.msra.mxu0 %v887
  %929 = vmatprep.subr.mxu0 0.0
  %930 = vmatpush1.msra.mxu0 %v886
  %931 = vmatprep.subr.mxu0 0.0
  %932 = vmatpush1.msra.mxu0 %v885
  %933 = vmatprep.subr.mxu0 0.0
  %934 = vmatpush2.msra.mxu0 0.0
  %935 = vmatprep.subr.mxu0 0.0
  %936 = vmatpush2.msra.mxu0 0.0
  %937 = vmatprep.subr.mxu0 0.0
  %938 = vmatpush2.msra.mxu0 0.0
  %939 = vmatprep.subr.mxu0 0.0
  %940 = vmatpush2.msra.mxu0 0.0
  %941 = vmatprep.subr.mxu0 0.0
  %942 = vmatpush2.msra.mxu0 0.0
  %943 = vmatprep.subr.mxu0 0.0
  %944 = vmatpush2.msra.mxu0 0.0
  %945 = vmatprep.subr.mxu0 0.0
  %946 = vmatpush2.msra.mxu0 0.0
  %947 = vmatprep.subr.mxu0 0.0
  %948 = vmatpush2.msra.mxu0 0.0
  %949 = vmatprep.subr.mxu0 0.0
  %950 = vmatpush2.msra.mxu0 0.0
  %951 = vmatprep.subr.mxu0 0.0
  %952 = vmatpush2.msra.mxu0 0.0
  %953 = vmatprep.subr.mxu0 0.0
  %954 = vmatpush2.msra.mxu0 0.0
  %955 = vmatprep.subr.mxu0 0.0
  %956 = vmatpush2.msra.mxu0 0.0
  %957 = vmatprep.subr.mxu0 0.0
  %958 = vmatpush2.msra.mxu0 0.0
  %959 = vmatprep.subr.mxu0 0.0
  %960 = vmatpush2.msra.mxu0 0.0
  %961 = vmatprep.subr.mxu0 0.0
  %962 = vmatpush2.msra.mxu0 0.0
  %963 = vmatprep.subr.mxu0 0.0
  %964 = vmatpush2.msra.mxu0 0.0
  %965 = vmatprep.mubr.f32.mxu0 0.0
  %966 = vmatmul.mubr.f32.gmra.mxu0 %v333
  %v967 = vpop.f32.mrf.mxu0
  %v968 = vadd.f32 0.0, %v967
  %v969 = vpop.f32.mrf.mxu0
  %970 = vdwg.mxu0
  %v971 = vadd.f32 %v867, %v968
  %s972 = scalar_lea.vmem %s1, 384
  %v973 = vld [vmem:[%s972] sm:$0xf]
  %v974 = vld [vmem:[%s972 + $0x4] sm:$0xf]
  %v975 = vld [vmem:[%s972 + $0x8] sm:$0xf]
  %v976 = vld [vmem:[%s972 + $0xc] sm:$0xf]
  %v977 = vld [vmem:[%s972 + $0x10] sm:$0xf]
  %v978 = vld [vmem:[%s972 + $0x14] sm:$0xf]
  %v979 = vld [vmem:[%s972 + $0x18] sm:$0xf]
  %v980 = vld [vmem:[%s972 + $0x1c] sm:$0xf]
  %v981 = vld [vmem:[%s972 + $0x20] sm:$0xf]
  %v982 = vld [vmem:[%s972 + $0x24] sm:$0xf]
  %v983 = vld [vmem:[%s972 + $0x28] sm:$0xf]
  %v984 = vld [vmem:[%s972 + $0x2c] sm:$0xf]
  %v985 = vld [vmem:[%s972 + $0x30] sm:$0xf]
  %v986 = vld [vmem:[%s972 + $0x34] sm:$0xf]
  %v987 = vld [vmem:[%s972 + $0x38] sm:$0xf]
  %v988 = vld [vmem:[%s972 + $0x3c] sm:$0xf]
  %v989 = vunpack.c.l.bf16 %v973
  %v990 = vunpack.c.l.bf16 %v974
  %v991 = vunpack.c.l.bf16 %v975
  %v992 = vunpack.c.l.bf16 %v976
  %v993 = vunpack.c.l.bf16 %v977
  %v994 = vunpack.c.l.bf16 %v978
  %v995 = vunpack.c.l.bf16 %v979
  %v996 = vunpack.c.l.bf16 %v980
  %v997 = vunpack.c.l.bf16 %v981
  %v998 = vunpack.c.l.bf16 %v982
  %v999 = vunpack.c.l.bf16 %v983
  %v1000 = vunpack.c.l.bf16 %v984
  %v1001 = vunpack.c.l.bf16 %v985
  %v1002 = vunpack.c.l.bf16 %v986
  %v1003 = vunpack.c.l.bf16 %v987
  %v1004 = vunpack.c.l.bf16 %v988
  %1005 = vmatprep.subr.mxu0 0.0
  %1006 = vmatpush1.msra.mxu0 %v1004
  %1007 = vmatprep.subr.mxu0 0.0
  %1008 = vmatpush1.msra.mxu0 %v1003
  %1009 = vmatprep.subr.mxu0 0.0
  %1010 = vmatpush1.msra.mxu0 %v1002
  %1011 = vmatprep.subr.mxu0 0.0
  %1012 = vmatpush1.msra.mxu0 %v1001
  %1013 = vmatprep.subr.mxu0 0.0
  %1014 = vmatpush1.msra.mxu0 %v1000
  %1015 = vmatprep.subr.mxu0 0.0
  %1016 = vmatpush1.msra.mxu0 %v999
  %1017 = vmatprep.subr.mxu0 0.0
  %1018 = vmatpush1.msra.mxu0 %v998
  %1019 = vmatprep.subr.mxu0 0.0
  %1020 = vmatpush1.msra.mxu0 %v997
  %1021 = vmatprep.subr.mxu0 0.0
  %1022 = vmatpush1.msra.mxu0 %v996
  %1023 = vmatprep.subr.mxu0 0.0
  %1024 = vmatpush1.msra.mxu0 %v995
  %1025 = vmatprep.subr.mxu0 0.0
  %1026 = vmatpush1.msra.mxu0 %v994
  %1027 = vmatprep.subr.mxu0 0.0
  %1028 = vmatpush1.msra.mxu0 %v993
  %1029 = vmatprep.subr.mxu0 0.0
  %1030 = vmatpush1.msra.mxu0 %v992
  %1031 = vmatprep.subr.mxu0 0.0
  %1032 = vmatpush1.msra.mxu0 %v991
  %1033 = vmatprep.subr.mxu0 0.0
  %1034 = vmatpush1.msra.mxu0 %v990
  %1035 = vmatprep.subr.mxu0 0.0
  %1036 = vmatpush1.msra.mxu0 %v989
  %1037 = vmatprep.subr.mxu0 0.0
  %1038 = vmatpush2.msra.mxu0 0.0
  %1039 = vmatprep.subr.mxu0 0.0
  %1040 = vmatpush2.msra.mxu0 0.0
  %1041 = vmatprep.subr.mxu0 0.0
  %1042 = vmatpush2.msra.mxu0 0.0
  %1043 = vmatprep.subr.mxu0 0.0
  %1044 = vmatpush2.msra.mxu0 0.0
  %1045 = vmatprep.subr.mxu0 0.0
  %1046 = vmatpush2.msra.mxu0 0.0
  %1047 = vmatprep.subr.mxu0 0.0
  %1048 = vmatpush2.msra.mxu0 0.0
  %1049 = vmatprep.subr.mxu0 0.0
  %1050 = vmatpush2.msra.mxu0 0.0
  %1051 = vmatprep.subr.mxu0 0.0
  %1052 = vmatpush2.msra.mxu0 0.0
  %1053 = vmatprep.subr.mxu0 0.0
  %1054 = vmatpush2.msra.mxu0 0.0
  %1055 = vmatprep.subr.mxu0 0.0
  %1056 = vmatpush2.msra.mxu0 0.0
  %1057 = vmatprep.subr.mxu0 0.0
  %1058 = vmatpush2.msra.mxu0 0.0
  %1059 = vmatprep.subr.mxu0 0.0
  %1060 = vmatpush2.msra.mxu0 0.0
  %1061 = vmatprep.subr.mxu0 0.0
  %1062 = vmatpush2.msra.mxu0 0.0
  %1063 = vmatprep.subr.mxu0 0.0
  %1064 = vmatpush2.msra.mxu0 0.0
  %1065 = vmatprep.subr.mxu0 0.0
  %1066 = vmatpush2.msra.mxu0 0.0
  %1067 = vmatprep.subr.mxu0 0.0
  %1068 = vmatpush2.msra.mxu0 0.0
  %1069 = vmatprep.mubr.f32.mxu0 0.0
  %1070 = vmatmul.mubr.f32.gmra.mxu0 %v338
  %v1071 = vpop.f32.mrf.mxu0
  %v1072 = vadd.f32 0.0, %v1071
  %v1073 = vpop.f32.mrf.mxu0
  %1074 = vdwg.mxu0
  %v1075 = vadd.f32 %v971, %v1072
  %s1076 = scalar_lea.vmem %s1, 448
  %v1077 = vld [vmem:[%s1076] sm:$0xf]
  %v1078 = vld [vmem:[%s1076 + $0x4] sm:$0xf]
  %v1079 = vld [vmem:[%s1076 + $0x8] sm:$0xf]
  %v1080 = vld [vmem:[%s1076 + $0xc] sm:$0xf]
  %v1081 = vld [vmem:[%s1076 + $0x10] sm:$0xf]
  %v1082 = vld [vmem:[%s1076 + $0x14] sm:$0xf]
  %v1083 = vld [vmem:[%s1076 + $0x18] sm:$0xf]
  %v1084 = vld [vmem:[%s1076 + $0x1c] sm:$0xf]
  %v1085 = vld [vmem:[%s1076 + $0x20] sm:$0xf]
  %v1086 = vld [vmem:[%s1076 + $0x24] sm:$0xf]
  %v1087 = vld [vmem:[%s1076 + $0x28] sm:$0xf]
  %v1088 = vld [vmem:[%s1076 + $0x2c] sm:$0xf]
  %v1089 = vld [vmem:[%s1076 + $0x30] sm:$0xf]
  %v1090 = vld [vmem:[%s1076 + $0x34] sm:$0xf]
  %v1091 = vld [vmem:[%s1076 + $0x38] sm:$0xf]
  %v1092 = vld [vmem:[%s1076 + $0x3c] sm:$0xf]
  %v1093 = vunpack.c.l.bf16 %v1077
  %v1094 = vunpack.c.l.bf16 %v1078
  %v1095 = vunpack.c.l.bf16 %v1079
  %v1096 = vunpack.c.l.bf16 %v1080
  %v1097 = vunpack.c.l.bf16 %v1081
  %v1098 = vunpack.c.l.bf16 %v1082
  %v1099 = vunpack.c.l.bf16 %v1083
  %v1100 = vunpack.c.l.bf16 %v1084
  %v1101 = vunpack.c.l.bf16 %v1085
  %v1102 = vunpack.c.l.bf16 %v1086
  %v1103 = vunpack.c.l.bf16 %v1087
  %v1104 = vunpack.c.l.bf16 %v1088
  %v1105 = vunpack.c.l.bf16 %v1089
  %v1106 = vunpack.c.l.bf16 %v1090
  %v1107 = vunpack.c.l.bf16 %v1091
  %v1108 = vunpack.c.l.bf16 %v1092
  %1109 = vmatprep.subr.mxu0 0.0
  %1110 = vmatpush1.msra.mxu0 %v1108
  %1111 = vmatprep.subr.mxu0 0.0
  %1112 = vmatpush1.msra.mxu0 %v1107
  %1113 = vmatprep.subr.mxu0 0.0
  %1114 = vmatpush1.msra.mxu0 %v1106
  %1115 = vmatprep.subr.mxu0 0.0
  %1116 = vmatpush1.msra.mxu0 %v1105
  %1117 = vmatprep.subr.mxu0 0.0
  %1118 = vmatpush1.msra.mxu0 %v1104
  %1119 = vmatprep.subr.mxu0 0.0
  %1120 = vmatpush1.msra.mxu0 %v1103
  %1121 = vmatprep.subr.mxu0 0.0
  %1122 = vmatpush1.msra.mxu0 %v1102
  %1123 = vmatprep.subr.mxu0 0.0
  %1124 = vmatpush1.msra.mxu0 %v1101
  %1125 = vmatprep.subr.mxu0 0.0
  %1126 = vmatpush1.msra.mxu0 %v1100
  %1127 = vmatprep.subr.mxu0 0.0
  %1128 = vmatpush1.msra.mxu0 %v1099
  %1129 = vmatprep.subr.mxu0 0.0
  %1130 = vmatpush1.msra.mxu0 %v1098
  %1131 = vmatprep.subr.mxu0 0.0
  %1132 = vmatpush1.msra.mxu0 %v1097
  %1133 = vmatprep.subr.mxu0 0.0
  %1134 = vmatpush1.msra.mxu0 %v1096
  %1135 = vmatprep.subr.mxu0 0.0
  %1136 = vmatpush1.msra.mxu0 %v1095
  %1137 = vmatprep.subr.mxu0 0.0
  %1138 = vmatpush1.msra.mxu0 %v1094
  %1139 = vmatprep.subr.mxu0 0.0
  %1140 = vmatpush1.msra.mxu0 %v1093
  %1141 = vmatprep.subr.mxu0 0.0
  %1142 = vmatpush2.msra.mxu0 0.0
  %1143 = vmatprep.subr.mxu0 0.0
  %1144 = vmatpush2.msra.mxu0 0.0
  %1145 = vmatprep.subr.mxu0 0.0
  %1146 = vmatpush2.msra.mxu0 0.0
  %1147 = vmatprep.subr.mxu0 0.0
  %1148 = vmatpush2.msra.mxu0 0.0
  %1149 = vmatprep.subr.mxu0 0.0
  %1150 = vmatpush2.msra.mxu0 0.0
  %1151 = vmatprep.subr.mxu0 0.0
  %1152 = vmatpush2.msra.mxu0 0.0
  %1153 = vmatprep.subr.mxu0 0.0
  %1154 = vmatpush2.msra.mxu0 0.0
  %1155 = vmatprep.subr.mxu0 0.0
  %1156 = vmatpush2.msra.mxu0 0.0
  %1157 = vmatprep.subr.mxu0 0.0
  %1158 = vmatpush2.msra.mxu0 0.0
  %1159 = vmatprep.subr.mxu0 0.0
  %1160 = vmatpush2.msra.mxu0 0.0
  %1161 = vmatprep.subr.mxu0 0.0
  %1162 = vmatpush2.msra.mxu0 0.0
  %1163 = vmatprep.subr.mxu0 0.0
  %1164 = vmatpush2.msra.mxu0 0.0
  %1165 = vmatprep.subr.mxu0 0.0
  %1166 = vmatpush2.msra.mxu0 0.0
  %1167 = vmatprep.subr.mxu0 0.0
  %1168 = vmatpush2.msra.mxu0 0.0
  %1169 = vmatprep.subr.mxu0 0.0
  %1170 = vmatpush2.msra.mxu0 0.0
  %1171 = vmatprep.subr.mxu0 0.0
  %1172 = vmatpush2.msra.mxu0 0.0
  %1173 = vmatprep.mubr.f32.mxu0 0.0
  %1174 = vmatmul.mubr.f32.gmra.mxu0 %v343
  %v1175 = vpop.f32.mrf.mxu0
  %v1176 = vadd.f32 0.0, %v1175
  %v1177 = vpop.f32.mrf.mxu0
  %1178 = vdwg.mxu0
  %v1179 = vadd.f32 %v1075, %v1176
  %s1180 = scalar_lea.vmem %s1, 512
  %v1181 = vld [vmem:[%s1180] sm:$0xf]
  %v1182 = vld [vmem:[%s1180 + $0x4] sm:$0xf]
  %v1183 = vld [vmem:[%s1180 + $0x8] sm:$0xf]
  %v1184 = vld [vmem:[%s1180 + $0xc] sm:$0xf]
  %v1185 = vld [vmem:[%s1180 + $0x10] sm:$0xf]
  %v1186 = vld [vmem:[%s1180 + $0x14] sm:$0xf]
  %v1187 = vld [vmem:[%s1180 + $0x18] sm:$0xf]
  %v1188 = vld [vmem:[%s1180 + $0x1c] sm:$0xf]
  %v1189 = vld [vmem:[%s1180 + $0x20] sm:$0xf]
  %v1190 = vld [vmem:[%s1180 + $0x24] sm:$0xf]
  %v1191 = vld [vmem:[%s1180 + $0x28] sm:$0xf]
  %v1192 = vld [vmem:[%s1180 + $0x2c] sm:$0xf]
  %v1193 = vld [vmem:[%s1180 + $0x30] sm:$0xf]
  %v1194 = vld [vmem:[%s1180 + $0x34] sm:$0xf]
  %v1195 = vld [vmem:[%s1180 + $0x38] sm:$0xf]
  %v1196 = vld [vmem:[%s1180 + $0x3c] sm:$0xf]
  %v1197 = vunpack.c.l.bf16 %v1181
  %v1198 = vunpack.c.l.bf16 %v1182
  %v1199 = vunpack.c.l.bf16 %v1183
  %v1200 = vunpack.c.l.bf16 %v1184
  %v1201 = vunpack.c.l.bf16 %v1185
  %v1202 = vunpack.c.l.bf16 %v1186
  %v1203 = vunpack.c.l.bf16 %v1187
  %v1204 = vunpack.c.l.bf16 %v1188
  %v1205 = vunpack.c.l.bf16 %v1189
  %v1206 = vunpack.c.l.bf16 %v1190
  %v1207 = vunpack.c.l.bf16 %v1191
  %v1208 = vunpack.c.l.bf16 %v1192
  %v1209 = vunpack.c.l.bf16 %v1193
  %v1210 = vunpack.c.l.bf16 %v1194
  %v1211 = vunpack.c.l.bf16 %v1195
  %v1212 = vunpack.c.l.bf16 %v1196
  %1213 = vmatprep.subr.mxu0 0.0
  %1214 = vmatpush1.msra.mxu0 %v1212
  %1215 = vmatprep.subr.mxu0 0.0
  %1216 = vmatpush1.msra.mxu0 %v1211
  %1217 = vmatprep.subr.mxu0 0.0
  %1218 = vmatpush1.msra.mxu0 %v1210
  %1219 = vmatprep.subr.mxu0 0.0
  %1220 = vmatpush1.msra.mxu0 %v1209
  %1221 = vmatprep.subr.mxu0 0.0
  %1222 = vmatpush1.msra.mxu0 %v1208
  %1223 = vmatprep.subr.mxu0 0.0
  %1224 = vmatpush1.msra.mxu0 %v1207
  %1225 = vmatprep.subr.mxu0 0.0
  %1226 = vmatpush1.msra.mxu0 %v1206
  %1227 = vmatprep.subr.mxu0 0.0
  %1228 = vmatpush1.msra.mxu0 %v1205
  %1229 = vmatprep.subr.mxu0 0.0
  %1230 = vmatpush1.msra.mxu0 %v1204
  %1231 = vmatprep.subr.mxu0 0.0
  %1232 = vmatpush1.msra.mxu0 %v1203
  %1233 = vmatprep.subr.mxu0 0.0
  %1234 = vmatpush1.msra.mxu0 %v1202
  %1235 = vmatprep.subr.mxu0 0.0
  %1236 = vmatpush1.msra.mxu0 %v1201
  %1237 = vmatprep.subr.mxu0 0.0
  %1238 = vmatpush1.msra.mxu0 %v1200
  %1239 = vmatprep.subr.mxu0 0.0
  %1240 = vmatpush1.msra.mxu0 %v1199
  %1241 = vmatprep.subr.mxu0 0.0
  %1242 = vmatpush1.msra.mxu0 %v1198
  %1243 = vmatprep.subr.mxu0 0.0
  %1244 = vmatpush1.msra.mxu0 %v1197
  %1245 = vmatprep.subr.mxu0 0.0
  %1246 = vmatpush2.msra.mxu0 0.0
  %1247 = vmatprep.subr.mxu0 0.0
  %1248 = vmatpush2.msra.mxu0 0.0
  %1249 = vmatprep.subr.mxu0 0.0
  %1250 = vmatpush2.msra.mxu0 0.0
  %1251 = vmatprep.subr.mxu0 0.0
  %1252 = vmatpush2.msra.mxu0 0.0
  %1253 = vmatprep.subr.mxu0 0.0
  %1254 = vmatpush2.msra.mxu0 0.0
  %1255 = vmatprep.subr.mxu0 0.0
  %1256 = vmatpush2.msra.mxu0 0.0
  %1257 = vmatprep.subr.mxu0 0.0
  %1258 = vmatpush2.msra.mxu0 0.0
  %1259 = vmatprep.subr.mxu0 0.0
  %1260 = vmatpush2.msra.mxu0 0.0
  %1261 = vmatprep.subr.mxu0 0.0
  %1262 = vmatpush2.msra.mxu0 0.0
  %1263 = vmatprep.subr.mxu0 0.0
  %1264 = vmatpush2.msra.mxu0 0.0
  %1265 = vmatprep.subr.mxu0 0.0
  %1266 = vmatpush2.msra.mxu0 0.0
  %1267 = vmatprep.subr.mxu0 0.0
  %1268 = vmatpush2.msra.mxu0 0.0
  %1269 = vmatprep.subr.mxu0 0.0
  %1270 = vmatpush2.msra.mxu0 0.0
  %1271 = vmatprep.subr.mxu0 0.0
  %1272 = vmatpush2.msra.mxu0 0.0
  %1273 = vmatprep.subr.mxu0 0.0
  %1274 = vmatpush2.msra.mxu0 0.0
  %1275 = vmatprep.subr.mxu0 0.0
  %1276 = vmatpush2.msra.mxu0 0.0
  %1277 = vmatprep.mubr.f32.mxu0 0.0
  %1278 = vmatmul.mubr.f32.gmra.mxu0 %v348
  %v1279 = vpop.f32.mrf.mxu0
  %v1280 = vadd.f32 0.0, %v1279
  %v1281 = vpop.f32.mrf.mxu0
  %1282 = vdwg.mxu0
  %v1283 = vadd.f32 %v1179, %v1280
  %v1284 = vsel %vm60, %v1283, 0.0
  %v1285 = vld [vmem:[%s4 + $0x8] sm:$0xff]
  %v1286 = vadd.f32 %v1284, %v1285
  %1287 = vst [vmem:[%s5] sm:$0xff] %v1286
  // Predicated region
  $region22: #{net_forward.1} parent=0 // pred_check
    _
  $region23: #{net_forward.1} parent=0 // pred_check_branch
    %1289 = sbr.rel (0) target = $region25
  $region24: #{net_forward.1} parent=0 // pred_region
    _
  $region25: #{net_forward.1} parent=0 // pred_fallthru
    _
  // Predicated region
  $region26: #{net_forward.1} parent=0 // pred_check
    _
  $region27: #{net_forward.1} parent=0 // pred_check_branch
    %1291 = sbr.rel (0) target = $region29
  $region28: #{net_forward.1} parent=0 // pred_region
    _
  $region29: #{net_forward.1} parent=0 // pred_fallthru
    _

</llo_original>
